<compile_context>
chip_gen: v7x
topology: tpu7x:2x2x1
jax: 0.10.0
libtpu: 0.0.40
codegen_flags: <defaults>
</compile_context>

<pallas_src>
import jax
import jax.numpy as jnp
import numpy as np
from jax.experimental import pallas as pl
from jax.experimental.pallas import tpu as pltpu

# ----------------------------- model sizes ---------------------------------
SEQ_LEN = 8        # S
BATCH = 2          # B
D_MODEL = 32       # input_size
N_HEADS = 4
HEAD_DIM = D_MODEL // N_HEADS
D_FF = 64          # encoder-layer feedforward dim
MAX_LEN = 16       # position-embedding table rows
OUTPUT_SIZE = 8    # unused in the pretraining path
LN_EPS = 1e-5

_BATCH_IS_POW2 = (BATCH & (BATCH - 1)) == 0
_LOG2_BATCH = int(np.log2(BATCH)) if _BATCH_IS_POW2 else 0

# -------------------- packed weight-slab layout (rows) ----------------------
# matrices (rows x cols used):
R_WQKV = 0        # (32, 96)
R_W1 = 32         # (32, 64)
R_W2 = 64         # (64, 32)
R_WO = 128        # (32, 32)
R_WFC = 160       # (32, 32)
# bias / scale rows (1 row each, lane-packed):
R_BQKV = 192      # 96 lanes
R_BO = 193        # 32 lanes
R_G1 = 194
R_BE1 = 195
R_B1 = 196        # 64 lanes
R_B2 = 197
R_G2 = 198
R_BE2 = 199
R_BFC = 200
SLAB_ROWS = 208   # padded to multiple of 8
SLAB_COLS = 128   # one lane tile


def _layernorm(x, gamma, beta, eps=LN_EPS):
    mu = jnp.mean(x, axis=-1, keepdims=True)
    var = jnp.mean((x - mu) ** 2, axis=-1, keepdims=True)
    return (x - mu) * jax.lax.rsqrt(var + eps) * gamma + beta


# ------------------------------ Pallas kernel -------------------------------
def encoder_kernel(
    seq_lens_ref,          # SMEM (B,) int32
    x_ref,                 # (S*B, D)  seq-major fold of (src + pos): row r -> (s=r//B, b=r%B)
    w_ref,                 # (SLAB_ROWS, SLAB_COLS) packed weights/biases
    out_ref,               # (S*B, 2*D): [:, :D] encoder output, [:, D:] fc output
    heads_ref,             # VMEM scratch (S*B, D): per-head attention outputs
):
    D = D_MODEL
    SB = SEQ_LEN * BATCH

    x = x_ref[...]                                             # (SB, D)

    # ---- static slices of the single packed weight slab ---------------------
    wqkv = w_ref[R_WQKV:R_WQKV + D, 0:3 * D]
    w1 = w_ref[R_W1:R_W1 + D, 0:D_FF]
    w2 = w_ref[R_W2:R_W2 + D_FF, 0:D]
    wo = w_ref[R_WO:R_WO + D, 0:D]
    wfc = w_ref[R_WFC:R_WFC + D, 0:D]
    bqkv = w_ref[R_BQKV:R_BQKV + 1, 0:3 * D]
    bo = w_ref[R_BO:R_BO + 1, 0:D]
    g1 = w_ref[R_G1:R_G1 + 1, 0:D]
    be1 = w_ref[R_BE1:R_BE1 + 1, 0:D]
    b1 = w_ref[R_B1:R_B1 + 1, 0:D_FF]
    b2 = w_ref[R_B2:R_B2 + 1, 0:D]
    g2 = w_ref[R_G2:R_G2 + 1, 0:D]
    be2 = w_ref[R_BE2:R_BE2 + 1, 0:D]
    bfc = w_ref[R_BFC:R_BFC + 1, 0:D]

    # ---- QKV projection (1/sqrt(Hd) folded into q once) ---------------------
    qkv = jnp.dot(x, wqkv, preferred_element_type=jnp.float32) + bqkv
    scale = jnp.float32(1.0 / np.sqrt(HEAD_DIM))
    q = qkv[:, :D] * scale
    k = qkv[:, D:2 * D]
    v = qkv[:, 2 * D:]

    # ---- block-diagonal + key-padding mask from 1-D precursors --------------
    # Row r belongs to batch r % B; column c is (s = c // B, b = c % B).
    col_ids = jax.lax.broadcasted_iota(jnp.int32, (1, SB), 1)   # (1, SB)
    row_ids = jax.lax.broadcasted_iota(jnp.int32, (SB, 1), 0)   # (SB, 1)
    if _BATCH_IS_POW2:
        col_b = col_ids & (BATCH - 1)
        col_s = col_ids >> _LOG2_BATCH
        row_b = row_ids & (BATCH - 1)
    else:
        col_b = col_ids % BATCH
        col_s = col_ids // BATCH
        row_b = row_ids % BATCH
    col_len = jnp.zeros((1, SB), jnp.int32)
    row_len = jnp.zeros((SB, 1), jnp.int32)
    for b in range(BATCH):                                      # static, tiny
        col_len = jnp.where(col_b == b, seq_lens_ref[b], col_len)
        row_len = jnp.where(row_b == b, seq_lens_ref[b], row_len)
    # Broadcast to (SB, SB) only at the final compare/OR (2 full-tile VPU ops).
    invalid = jnp.logical_or(row_b != col_b, col_s >= col_len)  # (SB, SB)
    neg_big = jnp.float32(-1e30)

    # ---- per-head attention; heads lane-stored into VMEM scratch, then one
    #      (SB,D)@(D,D) output projection on the MXU -------------------------
    contract = (((1,), (1,)), ((), ()))  # contract last dims of both operands
    for h in range(N_HEADS):
        sl = slice(h * HEAD_DIM, (h + 1) * HEAD_DIM)
        scores = jax.lax.dot_general(
            q[:, sl], k[:, sl], contract, preferred_element_type=jnp.float32)
        scores = jnp.where(invalid, neg_big, scores)            # (SB, SB)
        scores = scores - jnp.max(scores, axis=-1, keepdims=True)
        p = jnp.exp(scores)
        p = p / jnp.sum(p, axis=-1, keepdims=True)              # exact softmax
        heads_ref[:, sl] = jnp.dot(p, v[:, sl],
                                   preferred_element_type=jnp.float32)
    attn = jnp.dot(heads_ref[...], wo, preferred_element_type=jnp.float32) + bo

    # ---- residual + layernorm 1 ---------------------------------------------
    y = _layernorm(x + attn, g1, be1)

    # ---- feed-forward (ReLU) + residual + layernorm 2 -----------------------
    hdn = jnp.maximum(jnp.dot(y, w1, preferred_element_type=jnp.float32) + b1, 0.0)
    ff = jnp.dot(hdn, w2, preferred_element_type=jnp.float32) + b2
    z = _layernorm(y + ff, g2, be2)

    # out.masked_fill(isnan(out), 0); a fully-padded sequence (seq_len==0)
    # yields NaN everywhere in PyTorch and is then zeroed -> reproduce that.
    z = jnp.where(jnp.isnan(z), jnp.float32(0.0), z)
    z = jnp.where(row_len == 0, jnp.float32(0.0), z)

    # ---- fc_pretraining: Linear(D, D) ---------------------------------------
    fc = jnp.dot(z, wfc, preferred_element_type=jnp.float32) + bfc

    # single lane-dense writeback: (SB, 2D) slab, split in wrapper
    out_ref[...] = jnp.concatenate([z, fc], axis=-1).astype(out_ref.dtype)


# ------------------------------ wrapper --------------------------------------
def pack_params(params):
    """Pack all weights/biases into one (SLAB_ROWS, SLAB_COLS) f32 slab (once)."""
    D = D_MODEL
    slab = np.zeros((SLAB_ROWS, SLAB_COLS), np.float32)
    slab[R_WQKV:R_WQKV + D, :3 * D] = np.asarray(params["wqkv"])
    slab[R_W1:R_W1 + D, :D_FF] = np.asarray(params["w1"])
    slab[R_W2:R_W2 + D_FF, :D] = np.asarray(params["w2"])
    slab[R_WO:R_WO + D, :D] = np.asarray(params["wo"])
    slab[R_WFC:R_WFC + D, :D] = np.asarray(params["wfc"])
    slab[R_BQKV, :3 * D] = np.asarray(params["bqkv"]).reshape(-1)
    slab[R_BO, :D] = np.asarray(params["bo"]).reshape(-1)
    slab[R_G1, :D] = np.asarray(params["g1"]).reshape(-1)
    slab[R_BE1, :D] = np.asarray(params["be1"]).reshape(-1)
    slab[R_B1, :D_FF] = np.asarray(params["b1"]).reshape(-1)
    slab[R_B2, :D] = np.asarray(params["b2"]).reshape(-1)
    slab[R_G2, :D] = np.asarray(params["g2"]).reshape(-1)
    slab[R_BE2, :D] = np.asarray(params["be2"]).reshape(-1)
    slab[R_BFC, :D] = np.asarray(params["bfc"]).reshape(-1)
    return {"wslab": jnp.asarray(slab), "pos_table": params["pos_table"]}


@jax.jit
def transformer_encoder_forward(src_sbd, seq_lens, packed):
    """src_sbd: (S, B, D) float32 (PyTorch seq-first), seq_lens: (B,) int32."""
    S, B, D = src_sbd.shape
    SB = S * B

    # positional-embedding add folded here (fused XLA op); seq-major fold keeps
    # PyTorch's seq-first layout -> no transposes anywhere.
    x_fold = (src_sbd + packed["pos_table"][:S, None, :]).reshape(SB, D)

    out = pl.pallas_call(
        encoder_kernel,
        grid=(1,),                              # single fat step (see v7x note)
        in_specs=[pl.BlockSpec(memory_space=pltpu.SMEM),            # seq_lens
                  pl.BlockSpec((SB, D), lambda i: (0, 0)),          # x
                  pl.BlockSpec((SLAB_ROWS, SLAB_COLS), lambda i: (0, 0))],  # weights
        out_specs=pl.BlockSpec((SB, 2 * D), lambda i: (0, 0)),
        out_shape=jax.ShapeDtypeStruct((SB, 2 * D), jnp.float32),
        scratch_shapes=[pltpu.VMEM((SB, D_MODEL), jnp.float32)],    # head outputs
        compiler_params=pltpu.CompilerParams(
            dimension_semantics=("arbitrary",)),
    )(seq_lens, x_fold, packed["wslab"])

    out = out.reshape(S, B, 2 * D)              # fused by jit into layout/slice ops
    neurons = out[..., :D]                      # (S, B, D) encoder output
    fc_out = out[..., D:]                       # (S, B, D) fc_pretraining output
    return fc_out, neurons, (None, None)


# ---------------------------- pure-JAX reference ------------------------------
def reference_forward(src_sbd, seq_lens, params):
    S, B, D = src_sbd.shape
    x = jnp.transpose(src_sbd, (1, 0, 2)) + params["pos_table"][None, :S]
    qkv = x @ params["wqkv"] + params["bqkv"]
    q, k, v = qkv[..., :D], qkv[..., D:2 * D], qkv[..., 2 * D:]

    def split(t):  # (B,S,D) -> (B,H,S,Hd)
        return t.reshape(B, S, N_HEADS, HEAD_DIM).transpose(0, 2, 1, 3)

    qh, kh, vh = split(q), split(k), split(v)
    scores = jnp.einsum("bhqd,bhkd->bhqk", qh, kh) / np.sqrt(HEAD_DIM)
    key_mask = (jnp.arange(S)[None, :] >= seq_lens[:, None])   # (B, S) True=pad
    scores = jnp.where(key_mask[:, None, None, :], -1e30, scores)
    p = jax.nn.softmax(scores, axis=-1)
    attn = jnp.einsum("bhqk,bhkd->bhqd", p, vh).transpose(0, 2, 1, 3)
    attn = attn.reshape(B, S, D) @ params["wo"] + params["bo"]

    def ln(t, g, bta):
        mu = t.mean(-1, keepdims=True)
        var = ((t - mu) ** 2).mean(-1, keepdims=True)
        return (t - mu) * jax.lax.rsqrt(var + LN_EPS) * g + bta

    y = ln(x + attn, params["g1"], params["be1"])
    ff = jnp.maximum(y @ params["w1"] + params["b1"], 0.0) @ params["w2"] + params["b2"]
    z = ln(y + ff, params["g2"], params["be2"])
    z = jnp.where(jnp.isnan(z), 0.0, z)
    fc = z @ params["wfc"] + params["bfc"]
    return jnp.transpose(fc, (1, 0, 2)), jnp.transpose(z, (1, 0, 2))


# --------------------------------- main ---------------------------------------
def init_params(key):
    ks = jax.random.split(key, 16)
    s = 0.05
    p = {
        "pos_table": jax.random.normal(ks[0], (MAX_LEN, D_MODEL), jnp.float32) * s,
        "wqkv": jax.random.normal(ks[1], (D_MODEL, 3 * D_MODEL), jnp.float32) * s,
        "bqkv": jax.random.normal(ks[2], (1, 3 * D_MODEL), jnp.float32) * s,
        "wo": jax.random.normal(ks[3], (D_MODEL, D_MODEL), jnp.float32) * s,
        "bo": jax.random.normal(ks[4], (1, D_MODEL), jnp.float32) * s,
        "g1": jnp.ones((1, D_MODEL), jnp.float32),
        "be1": jnp.zeros((1, D_MODEL), jnp.float32),
        "w1": jax.random.normal(ks[5], (D_MODEL, D_FF), jnp.float32) * s,
        "b1": jax.random.normal(ks[6], (1, D_FF), jnp.float32) * s,
        "w2": jax.random.normal(ks[7], (D_FF, D_MODEL), jnp.float32) * s,
        "b2": jax.random.normal(ks[8], (1, D_MODEL), jnp.float32) * s,
        "g2": jnp.ones((1, D_MODEL), jnp.float32),
        "be2": jnp.zeros((1, D_MODEL), jnp.float32),
        "wfc": jax.random.normal(ks[9], (D_MODEL, D_MODEL), jnp.float32) * s,
        "bfc": jax.random.normal(ks[10], (1, D_MODEL), jnp.float32) * s,
    }
    return p


if __name__ == "__main__":
    key = jax.random.PRNGKey(0)
    kp, kx = jax.random.split(key)
    params = init_params(kp)
    packed = pack_params(params)          # one-time weight packing (1 DMA/kernel)

    # padded packed sequence: (S, B, D) with per-batch valid lengths
    src = jax.random.normal(kx, (SEQ_LEN, BATCH, D_MODEL), jnp.float32)
    seq_lens = jnp.array([SEQ_LEN, 5], dtype=jnp.int32)
    # zero out padded timesteps (as pad_packed_sequence would)
    valid = (jnp.arange(SEQ_LEN)[:, None] < seq_lens[None, :])[:, :, None]
    src = jnp.where(valid, src, 0.0)

    out, neurons, _ = transformer_encoder_forward(src, seq_lens, packed)
    out = jax.block_until_ready(out)
    neurons = jax.block_until_ready(neurons)

    ref_out, ref_neurons = reference_forward(src, seq_lens, params)
    np.testing.assert_allclose(np.asarray(out), np.asarray(ref_out),
                               rtol=2e-3, atol=2e-3)
    np.testing.assert_allclose(np.asarray(neurons), np.asarray(ref_neurons),
                               rtol=2e-3, atol=2e-3)

    print("KERNEL_OK")
</pallas_src>

<mosaic_0001>
module attributes {stable_mosaic.version = 11 : i64} {
  func.func @encoder_kernel(%arg0: i32, %arg1: memref<2xi32, #tpu.memory_space<smem>>, %arg2: memref<16x32xf32, #tpu.memory_space<vmem>>, %arg3: memref<208x128xf32, #tpu.memory_space<vmem>>, %arg4: memref<16x64xf32, #tpu.memory_space<vmem>>, %arg5: memref<16x32xf32, #tpu.memory_space<vmem>>) attributes {dimension_semantics = [#tpu.dimension_semantics<arbitrary>], iteration_bounds = array<i64: 1>, scalar_prefetch = 0 : i64, scratch_operands = 1 : i64, tpu.core_type = #tpu.core_type<tc>, window_params = [{transform_indices = @transform_0, window_bounds = array<i64: 2>}, {pipeline_mode = #tpu.pipeline_mode<synchronous>, transform_indices = @transform_1, window_bounds = array<i64: 16, 32>}, {pipeline_mode = #tpu.pipeline_mode<synchronous>, transform_indices = @transform_2, window_bounds = array<i64: 208, 128>}, {pipeline_mode = #tpu.pipeline_mode<synchronous>, transform_indices = @transform_3, window_bounds = array<i64: 16, 64>}]} {
    %c0 = arith.constant 0 : index
    %c0_0 = arith.constant 0 : index
    %0 = vector.load %arg2[%c0, %c0_0] : memref<16x32xf32, #tpu.memory_space<vmem>>, vector<16x32xf32>
    %c0_1 = arith.constant 0 : index
    %c0_2 = arith.constant 0 : index
    %1 = vector.load %arg3[%c0_1, %c0_2] : memref<208x128xf32, #tpu.memory_space<vmem>>, vector<32x96xf32>
    %c32 = arith.constant 32 : index
    %c0_3 = arith.constant 0 : index
    %2 = vector.load %arg3[%c32, %c0_3] : memref<208x128xf32, #tpu.memory_space<vmem>>, vector<32x64xf32>
    %c64 = arith.constant 64 : index
    %c0_4 = arith.constant 0 : index
    %3 = vector.load %arg3[%c64, %c0_4] : memref<208x128xf32, #tpu.memory_space<vmem>>, vector<64x32xf32>
    %c128 = arith.constant 128 : index
    %c0_5 = arith.constant 0 : index
    %4 = vector.load %arg3[%c128, %c0_5] : memref<208x128xf32, #tpu.memory_space<vmem>>, vector<32x32xf32>
    %c160 = arith.constant 160 : index
    %c0_6 = arith.constant 0 : index
    %5 = vector.load %arg3[%c160, %c0_6] : memref<208x128xf32, #tpu.memory_space<vmem>>, vector<32x32xf32>
    %c192 = arith.constant 192 : index
    %c0_7 = arith.constant 0 : index
    %6 = vector.load %arg3[%c192, %c0_7] : memref<208x128xf32, #tpu.memory_space<vmem>>, vector<1x96xf32>
    %c193 = arith.constant 193 : index
    %c0_8 = arith.constant 0 : index
    %7 = vector.load %arg3[%c193, %c0_8] : memref<208x128xf32, #tpu.memory_space<vmem>>, vector<1x32xf32>
    %c194 = arith.constant 194 : index
    %c0_9 = arith.constant 0 : index
    %8 = vector.load %arg3[%c194, %c0_9] : memref<208x128xf32, #tpu.memory_space<vmem>>, vector<1x32xf32>
    %c195 = arith.constant 195 : index
    %c0_10 = arith.constant 0 : index
    %9 = vector.load %arg3[%c195, %c0_10] : memref<208x128xf32, #tpu.memory_space<vmem>>, vector<1x32xf32>
    %c196 = arith.constant 196 : index
    %c0_11 = arith.constant 0 : index
    %10 = vector.load %arg3[%c196, %c0_11] : memref<208x128xf32, #tpu.memory_space<vmem>>, vector<1x64xf32>
    %c197 = arith.constant 197 : index
    %c0_12 = arith.constant 0 : index
    %11 = vector.load %arg3[%c197, %c0_12] : memref<208x128xf32, #tpu.memory_space<vmem>>, vector<1x32xf32>
    %c198 = arith.constant 198 : index
    %c0_13 = arith.constant 0 : index
    %12 = vector.load %arg3[%c198, %c0_13] : memref<208x128xf32, #tpu.memory_space<vmem>>, vector<1x32xf32>
    %c199 = arith.constant 199 : index
    %c0_14 = arith.constant 0 : index
    %13 = vector.load %arg3[%c199, %c0_14] : memref<208x128xf32, #tpu.memory_space<vmem>>, vector<1x32xf32>
    %c200 = arith.constant 200 : index
    %c0_15 = arith.constant 0 : index
    %14 = vector.load %arg3[%c200, %c0_15] : memref<208x128xf32, #tpu.memory_space<vmem>>, vector<1x32xf32>
    %cst = arith.constant dense<0.000000e+00> : vector<16x96xf32>
    %15 = tpu.matmul %0, %1, %cst {dimension_numbers = #tpu.dot_dimension_numbers<[1], [0], [0], [1], [0, 0, 1, 1], [], []>} : vector<16x32xf32>, vector<32x96xf32>, vector<16x96xf32> -> vector<16x96xf32>
    %16 = vector.broadcast %6 : vector<1x96xf32> to vector<16x96xf32>
    %17 = arith.addf %15, %16 : vector<16x96xf32>
    %18 = vector.extract_strided_slice %17 {offsets = [0, 0], sizes = [16, 32], strides = [1, 1]} : vector<16x96xf32> to vector<16x32xf32>
    %cst_16 = arith.constant 0.353553385 : f32
    %19 = vector.broadcast %cst_16 : f32 to vector<16x32xf32>
    %20 = arith.mulf %18, %19 : vector<16x32xf32>
    %21 = vector.extract_strided_slice %17 {offsets = [0, 32], sizes = [16, 32], strides = [1, 1]} : vector<16x96xf32> to vector<16x32xf32>
    %22 = vector.extract_strided_slice %17 {offsets = [0, 64], sizes = [16, 32], strides = [1, 1]} : vector<16x96xf32> to vector<16x32xf32>
    %23 = tpu.iota {dimensions = array<i32: 1>} : vector<1x16xi32>
    %24 = tpu.iota {dimensions = array<i32: 0>} : vector<16x1xi32>
    %c1_i32 = arith.constant 1 : i32
    %25 = vector.broadcast %c1_i32 : i32 to vector<1x16xi32>
    %26 = arith.andi %23, %25 : vector<1x16xi32>
    %c1_i32_17 = arith.constant 1 : i32
    %27 = vector.broadcast %c1_i32_17 : i32 to vector<1x16xi32>
    %28 = arith.shrsi %23, %27 : vector<1x16xi32>
    %c1_i32_18 = arith.constant 1 : i32
    %29 = vector.broadcast %c1_i32_18 : i32 to vector<16x1xi32>
    %30 = arith.andi %24, %29 : vector<16x1xi32>
    %c0_i32 = arith.constant 0 : i32
    %31 = vector.broadcast %c0_i32 : i32 to vector<1x16xi32>
    %c0_i32_19 = arith.constant 0 : i32
    %32 = vector.broadcast %c0_i32_19 : i32 to vector<16x1xi32>
    %c0_i32_20 = arith.constant 0 : i32
    %33 = vector.broadcast %c0_i32_20 : i32 to vector<1x16xi32>
    %34 = arith.cmpi eq, %26, %33 : vector<1x16xi32>
    %c0_21 = arith.constant 0 : index
    %35 = memref.load %arg1[%c0_21] : memref<2xi32, #tpu.memory_space<smem>>
    %36 = vector.broadcast %35 : i32 to vector<1x16xi32>
    %37 = arith.select %34, %36, %31 : vector<1x16xi1>, vector<1x16xi32>
    %c0_i32_22 = arith.constant 0 : i32
    %38 = vector.broadcast %c0_i32_22 : i32 to vector<16x1xi32>
    %39 = arith.cmpi eq, %30, %38 : vector<16x1xi32>
    %c0_23 = arith.constant 0 : index
    %40 = memref.load %arg1[%c0_23] : memref<2xi32, #tpu.memory_space<smem>>
    %41 = vector.broadcast %40 : i32 to vector<16x1xi32>
    %42 = arith.select %39, %41, %32 : vector<16x1xi1>, vector<16x1xi32>
    %c1_i32_24 = arith.constant 1 : i32
    %43 = vector.broadcast %c1_i32_24 : i32 to vector<1x16xi32>
    %44 = arith.cmpi eq, %26, %43 : vector<1x16xi32>
    %c1 = arith.constant 1 : index
    %45 = memref.load %arg1[%c1] : memref<2xi32, #tpu.memory_space<smem>>
    %46 = vector.broadcast %45 : i32 to vector<1x16xi32>
    %47 = arith.select %44, %46, %37 : vector<1x16xi1>, vector<1x16xi32>
    %c1_i32_25 = arith.constant 1 : i32
    %48 = vector.broadcast %c1_i32_25 : i32 to vector<16x1xi32>
    %49 = arith.cmpi eq, %30, %48 : vector<16x1xi32>
    %c1_26 = arith.constant 1 : index
    %50 = memref.load %arg1[%c1_26] : memref<2xi32, #tpu.memory_space<smem>>
    %51 = vector.broadcast %50 : i32 to vector<16x1xi32>
    %52 = arith.select %49, %51, %42 : vector<16x1xi1>, vector<16x1xi32>
    %53 = vector.broadcast %30 : vector<16x1xi32> to vector<16x16xi32>
    %54 = vector.broadcast %26 : vector<1x16xi32> to vector<16x16xi32>
    %55 = arith.cmpi ne, %53, %54 : vector<16x16xi32>
    %56 = arith.cmpi sge, %28, %47 : vector<1x16xi32>
    %57 = vector.broadcast %56 : vector<1x16xi1> to vector<16x16xi1>
    %58 = arith.ori %55, %57 : vector<16x16xi1>
    %59 = vector.extract_strided_slice %20 {offsets = [0, 0], sizes = [16, 8], strides = [1, 1]} : vector<16x32xf32> to vector<16x8xf32>
    %60 = vector.extract_strided_slice %21 {offsets = [0, 0], sizes = [16, 8], strides = [1, 1]} : vector<16x32xf32> to vector<16x8xf32>
    %cst_27 = arith.constant dense<0.000000e+00> : vector<16x16xf32>
    %61 = tpu.matmul %59, %60, %cst_27 {dimension_numbers = #tpu.dot_dimension_numbers<[1], [1], [0], [0], [0, 0, 1, 0], [], []>} : vector<16x8xf32>, vector<16x8xf32>, vector<16x16xf32> -> vector<16x16xf32>
    %cst_28 = arith.constant -1.000000e+30 : f32
    %62 = vector.broadcast %cst_28 : f32 to vector<16x16xf32>
    %63 = arith.select %58, %62, %61 : vector<16x16xi1>, vector<16x16xf32>
    %cst_29 = arith.constant dense<0xFF800000> : vector<16xf32>
    %64 = vector.multi_reduction <maximumf>, %63, %cst_29 [1] : vector<16x16xf32> to vector<16xf32>
    %65 = vector.shape_cast %64 : vector<16xf32> to vector<16x1xf32>
    %66 = vector.broadcast %65 : vector<16x1xf32> to vector<16x16xf32>
    %67 = arith.subf %63, %66 : vector<16x16xf32>
    %68 = math.exp %67 : vector<16x16xf32>
    %cst_30 = arith.constant dense<0.000000e+00> : vector<16xf32>
    %69 = vector.multi_reduction <add>, %68, %cst_30 [1] : vector<16x16xf32> to vector<16xf32>
    %70 = vector.shape_cast %69 : vector<16xf32> to vector<16x1xf32>
    %71 = vector.broadcast %70 : vector<16x1xf32> to vector<16x16xf32>
    %72 = arith.divf %68, %71 : vector<16x16xf32>
    %73 = vector.extract_strided_slice %22 {offsets = [0, 0], sizes = [16, 8], strides = [1, 1]} : vector<16x32xf32> to vector<16x8xf32>
    %cst_31 = arith.constant dense<0.000000e+00> : vector<16x8xf32>
    %74 = tpu.matmul %72, %73, %cst_31 {dimension_numbers = #tpu.dot_dimension_numbers<[1], [0], [0], [1], [0, 0, 1, 1], [], []>} : vector<16x16xf32>, vector<16x8xf32>, vector<16x8xf32> -> vector<16x8xf32>
    %c0_32 = arith.constant 0 : index
    %c0_33 = arith.constant 0 : index
    %75 = vector.load %arg5[%c0_32, %c0_33] : memref<16x32xf32, #tpu.memory_space<vmem>>, vector<16x8xf32>
    tpu.vector_store %arg5[%c0_32, %c0_33], %74 {strides = array<i32>} : memref<16x32xf32, #tpu.memory_space<vmem>>, vector<16x8xf32>,
    %76 = vector.extract_strided_slice %20 {offsets = [0, 8], sizes = [16, 8], strides = [1, 1]} : vector<16x32xf32> to vector<16x8xf32>
    %77 = vector.extract_strided_slice %21 {offsets = [0, 8], sizes = [16, 8], strides = [1, 1]} : vector<16x32xf32> to vector<16x8xf32>
    %cst_34 = arith.constant dense<0.000000e+00> : vector<16x16xf32>
    %78 = tpu.matmul %76, %77, %cst_34 {dimension_numbers = #tpu.dot_dimension_numbers<[1], [1], [0], [0], [0, 0, 1, 0], [], []>} : vector<16x8xf32>, vector<16x8xf32>, vector<16x16xf32> -> vector<16x16xf32>
    %cst_35 = arith.constant -1.000000e+30 : f32
    %79 = vector.broadcast %cst_35 : f32 to vector<16x16xf32>
    %80 = arith.select %58, %79, %78 : vector<16x16xi1>, vector<16x16xf32>
    %cst_36 = arith.constant dense<0xFF800000> : vector<16xf32>
    %81 = vector.multi_reduction <maximumf>, %80, %cst_36 [1] : vector<16x16xf32> to vector<16xf32>
    %82 = vector.shape_cast %81 : vector<16xf32> to vector<16x1xf32>
    %83 = vector.broadcast %82 : vector<16x1xf32> to vector<16x16xf32>
    %84 = arith.subf %80, %83 : vector<16x16xf32>
    %85 = math.exp %84 : vector<16x16xf32>
    %cst_37 = arith.constant dense<0.000000e+00> : vector<16xf32>
    %86 = vector.multi_reduction <add>, %85, %cst_37 [1] : vector<16x16xf32> to vector<16xf32>
    %87 = vector.shape_cast %86 : vector<16xf32> to vector<16x1xf32>
    %88 = vector.broadcast %87 : vector<16x1xf32> to vector<16x16xf32>
    %89 = arith.divf %85, %88 : vector<16x16xf32>
    %90 = vector.extract_strided_slice %22 {offsets = [0, 8], sizes = [16, 8], strides = [1, 1]} : vector<16x32xf32> to vector<16x8xf32>
    %cst_38 = arith.constant dense<0.000000e+00> : vector<16x8xf32>
    %91 = tpu.matmul %89, %90, %cst_38 {dimension_numbers = #tpu.dot_dimension_numbers<[1], [0], [0], [1], [0, 0, 1, 1], [], []>} : vector<16x16xf32>, vector<16x8xf32>, vector<16x8xf32> -> vector<16x8xf32>
    %c0_39 = arith.constant 0 : index
    %c8 = arith.constant 8 : index
    %92 = vector.load %arg5[%c0_39, %c8] : memref<16x32xf32, #tpu.memory_space<vmem>>, vector<16x8xf32>
    tpu.vector_store %arg5[%c0_39, %c8], %91 {strides = array<i32>} : memref<16x32xf32, #tpu.memory_space<vmem>>, vector<16x8xf32>,
    %93 = vector.extract_strided_slice %20 {offsets = [0, 16], sizes = [16, 8], strides = [1, 1]} : vector<16x32xf32> to vector<16x8xf32>
    %94 = vector.extract_strided_slice %21 {offsets = [0, 16], sizes = [16, 8], strides = [1, 1]} : vector<16x32xf32> to vector<16x8xf32>
    %cst_40 = arith.constant dense<0.000000e+00> : vector<16x16xf32>
    %95 = tpu.matmul %93, %94, %cst_40 {dimension_numbers = #tpu.dot_dimension_numbers<[1], [1], [0], [0], [0, 0, 1, 0], [], []>} : vector<16x8xf32>, vector<16x8xf32>, vector<16x16xf32> -> vector<16x16xf32>
    %cst_41 = arith.constant -1.000000e+30 : f32
    %96 = vector.broadcast %cst_41 : f32 to vector<16x16xf32>
    %97 = arith.select %58, %96, %95 : vector<16x16xi1>, vector<16x16xf32>
    %cst_42 = arith.constant dense<0xFF800000> : vector<16xf32>
    %98 = vector.multi_reduction <maximumf>, %97, %cst_42 [1] : vector<16x16xf32> to vector<16xf32>
    %99 = vector.shape_cast %98 : vector<16xf32> to vector<16x1xf32>
    %100 = vector.broadcast %99 : vector<16x1xf32> to vector<16x16xf32>
    %101 = arith.subf %97, %100 : vector<16x16xf32>
    %102 = math.exp %101 : vector<16x16xf32>
    %cst_43 = arith.constant dense<0.000000e+00> : vector<16xf32>
    %103 = vector.multi_reduction <add>, %102, %cst_43 [1] : vector<16x16xf32> to vector<16xf32>
    %104 = vector.shape_cast %103 : vector<16xf32> to vector<16x1xf32>
    %105 = vector.broadcast %104 : vector<16x1xf32> to vector<16x16xf32>
    %106 = arith.divf %102, %105 : vector<16x16xf32>
    %107 = vector.extract_strided_slice %22 {offsets = [0, 16], sizes = [16, 8], strides = [1, 1]} : vector<16x32xf32> to vector<16x8xf32>
    %cst_44 = arith.constant dense<0.000000e+00> : vector<16x8xf32>
    %108 = tpu.matmul %106, %107, %cst_44 {dimension_numbers = #tpu.dot_dimension_numbers<[1], [0], [0], [1], [0, 0, 1, 1], [], []>} : vector<16x16xf32>, vector<16x8xf32>, vector<16x8xf32> -> vector<16x8xf32>
    %c0_45 = arith.constant 0 : index
    %c16 = arith.constant 16 : index
    %109 = vector.load %arg5[%c0_45, %c16] : memref<16x32xf32, #tpu.memory_space<vmem>>, vector<16x8xf32>
    tpu.vector_store %arg5[%c0_45, %c16], %108 {strides = array<i32>} : memref<16x32xf32, #tpu.memory_space<vmem>>, vector<16x8xf32>,
    %110 = vector.extract_strided_slice %20 {offsets = [0, 24], sizes = [16, 8], strides = [1, 1]} : vector<16x32xf32> to vector<16x8xf32>
    %111 = vector.extract_strided_slice %21 {offsets = [0, 24], sizes = [16, 8], strides = [1, 1]} : vector<16x32xf32> to vector<16x8xf32>
    %cst_46 = arith.constant dense<0.000000e+00> : vector<16x16xf32>
    %112 = tpu.matmul %110, %111, %cst_46 {dimension_numbers = #tpu.dot_dimension_numbers<[1], [1], [0], [0], [0, 0, 1, 0], [], []>} : vector<16x8xf32>, vector<16x8xf32>, vector<16x16xf32> -> vector<16x16xf32>
    %cst_47 = arith.constant -1.000000e+30 : f32
    %113 = vector.broadcast %cst_47 : f32 to vector<16x16xf32>
    %114 = arith.select %58, %113, %112 : vector<16x16xi1>, vector<16x16xf32>
    %cst_48 = arith.constant dense<0xFF800000> : vector<16xf32>
    %115 = vector.multi_reduction <maximumf>, %114, %cst_48 [1] : vector<16x16xf32> to vector<16xf32>
    %116 = vector.shape_cast %115 : vector<16xf32> to vector<16x1xf32>
    %117 = vector.broadcast %116 : vector<16x1xf32> to vector<16x16xf32>
    %118 = arith.subf %114, %117 : vector<16x16xf32>
    %119 = math.exp %118 : vector<16x16xf32>
    %cst_49 = arith.constant dense<0.000000e+00> : vector<16xf32>
    %120 = vector.multi_reduction <add>, %119, %cst_49 [1] : vector<16x16xf32> to vector<16xf32>
    %121 = vector.shape_cast %120 : vector<16xf32> to vector<16x1xf32>
    %122 = vector.broadcast %121 : vector<16x1xf32> to vector<16x16xf32>
    %123 = arith.divf %119, %122 : vector<16x16xf32>
    %124 = vector.extract_strided_slice %22 {offsets = [0, 24], sizes = [16, 8], strides = [1, 1]} : vector<16x32xf32> to vector<16x8xf32>
    %cst_50 = arith.constant dense<0.000000e+00> : vector<16x8xf32>
    %125 = tpu.matmul %123, %124, %cst_50 {dimension_numbers = #tpu.dot_dimension_numbers<[1], [0], [0], [1], [0, 0, 1, 1], [], []>} : vector<16x16xf32>, vector<16x8xf32>, vector<16x8xf32> -> vector<16x8xf32>
    %c0_51 = arith.constant 0 : index
    %c24 = arith.constant 24 : index
    %126 = vector.load %arg5[%c0_51, %c24] : memref<16x32xf32, #tpu.memory_space<vmem>>, vector<16x8xf32>
    tpu.vector_store %arg5[%c0_51, %c24], %125 {strides = array<i32>} : memref<16x32xf32, #tpu.memory_space<vmem>>, vector<16x8xf32>,
    %c0_52 = arith.constant 0 : index
    %c0_53 = arith.constant 0 : index
    %127 = vector.load %arg5[%c0_52, %c0_53] : memref<16x32xf32, #tpu.memory_space<vmem>>, vector<16x32xf32>
    %cst_54 = arith.constant dense<0.000000e+00> : vector<16x32xf32>
    %128 = tpu.matmul %127, %4, %cst_54 {dimension_numbers = #tpu.dot_dimension_numbers<[1], [0], [0], [1], [0, 0, 1, 1], [], []>} : vector<16x32xf32>, vector<32x32xf32>, vector<16x32xf32> -> vector<16x32xf32>
    %129 = vector.broadcast %7 : vector<1x32xf32> to vector<16x32xf32>
    %130 = arith.addf %128, %129 : vector<16x32xf32>
    %131 = arith.addf %0, %130 : vector<16x32xf32>
    %cst_55 = arith.constant dense<0.000000e+00> : vector<16xf32>
    %132 = vector.multi_reduction <add>, %131, %cst_55 [1] : vector<16x32xf32> to vector<16xf32>
    %133 = vector.shape_cast %132 : vector<16xf32> to vector<16x1xf32>
    %cst_56 = arith.constant 3.200000e+01 : f32
    %134 = vector.broadcast %cst_56 : f32 to vector<16x1xf32>
    %135 = arith.divf %133, %134 : vector<16x1xf32>
    %136 = vector.broadcast %135 : vector<16x1xf32> to vector<16x32xf32>
    %137 = arith.subf %131, %136 : vector<16x32xf32>
    %138 = arith.mulf %137, %137 : vector<16x32xf32>
    %cst_57 = arith.constant dense<0.000000e+00> : vector<16xf32>
    %139 = vector.multi_reduction <add>, %138, %cst_57 [1] : vector<16x32xf32> to vector<16xf32>
    %140 = vector.shape_cast %139 : vector<16xf32> to vector<16x1xf32>
    %cst_58 = arith.constant 3.200000e+01 : f32
    %141 = vector.broadcast %cst_58 : f32 to vector<16x1xf32>
    %142 = arith.divf %140, %141 : vector<16x1xf32>
    %143 = vector.broadcast %135 : vector<16x1xf32> to vector<16x32xf32>
    %144 = arith.subf %131, %143 : vector<16x32xf32>
    %cst_59 = arith.constant 9.99999974E-6 : f32
    %145 = vector.broadcast %cst_59 : f32 to vector<16x1xf32>
    %146 = arith.addf %142, %145 : vector<16x1xf32>
    %147 = math.rsqrt %146 : vector<16x1xf32>
    %148 = vector.broadcast %147 : vector<16x1xf32> to vector<16x32xf32>
    %149 = arith.mulf %144, %148 : vector<16x32xf32>
    %150 = vector.broadcast %8 : vector<1x32xf32> to vector<16x32xf32>
    %151 = arith.mulf %149, %150 : vector<16x32xf32>
    %152 = vector.broadcast %9 : vector<1x32xf32> to vector<16x32xf32>
    %153 = arith.addf %151, %152 : vector<16x32xf32>
    %cst_60 = arith.constant dense<0.000000e+00> : vector<16x64xf32>
    %154 = tpu.matmul %153, %2, %cst_60 {dimension_numbers = #tpu.dot_dimension_numbers<[1], [0], [0], [1], [0, 0, 1, 1], [], []>} : vector<16x32xf32>, vector<32x64xf32>, vector<16x64xf32> -> vector<16x64xf32>
    %155 = vector.broadcast %10 : vector<1x64xf32> to vector<16x64xf32>
    %156 = arith.addf %154, %155 : vector<16x64xf32>
    %cst_61 = arith.constant 0.000000e+00 : f32
    %157 = vector.broadcast %cst_61 : f32 to vector<16x64xf32>
    %158 = arith.maximumf %156, %157 : vector<16x64xf32>
    %cst_62 = arith.constant dense<0.000000e+00> : vector<16x32xf32>
    %159 = tpu.matmul %158, %3, %cst_62 {dimension_numbers = #tpu.dot_dimension_numbers<[1], [0], [0], [1], [0, 0, 1, 1], [], []>} : vector<16x64xf32>, vector<64x32xf32>, vector<16x32xf32> -> vector<16x32xf32>
    %160 = vector.broadcast %11 : vector<1x32xf32> to vector<16x32xf32>
    %161 = arith.addf %159, %160 : vector<16x32xf32>
    %162 = arith.addf %153, %161 : vector<16x32xf32>
    %cst_63 = arith.constant dense<0.000000e+00> : vector<16xf32>
    %163 = vector.multi_reduction <add>, %162, %cst_63 [1] : vector<16x32xf32> to vector<16xf32>
    %164 = vector.shape_cast %163 : vector<16xf32> to vector<16x1xf32>
    %cst_64 = arith.constant 3.200000e+01 : f32
    %165 = vector.broadcast %cst_64 : f32 to vector<16x1xf32>
    %166 = arith.divf %164, %165 : vector<16x1xf32>
    %167 = vector.broadcast %166 : vector<16x1xf32> to vector<16x32xf32>
    %168 = arith.subf %162, %167 : vector<16x32xf32>
    %169 = arith.mulf %168, %168 : vector<16x32xf32>
    %cst_65 = arith.constant dense<0.000000e+00> : vector<16xf32>
    %170 = vector.multi_reduction <add>, %169, %cst_65 [1] : vector<16x32xf32> to vector<16xf32>
    %171 = vector.shape_cast %170 : vector<16xf32> to vector<16x1xf32>
    %cst_66 = arith.constant 3.200000e+01 : f32
    %172 = vector.broadcast %cst_66 : f32 to vector<16x1xf32>
    %173 = arith.divf %171, %172 : vector<16x1xf32>
    %174 = vector.broadcast %166 : vector<16x1xf32> to vector<16x32xf32>
    %175 = arith.subf %162, %174 : vector<16x32xf32>
    %cst_67 = arith.constant 9.99999974E-6 : f32
    %176 = vector.broadcast %cst_67 : f32 to vector<16x1xf32>
    %177 = arith.addf %173, %176 : vector<16x1xf32>
    %178 = math.rsqrt %177 : vector<16x1xf32>
    %179 = vector.broadcast %178 : vector<16x1xf32> to vector<16x32xf32>
    %180 = arith.mulf %175, %179 : vector<16x32xf32>
    %181 = vector.broadcast %12 : vector<1x32xf32> to vector<16x32xf32>
    %182 = arith.mulf %180, %181 : vector<16x32xf32>
    %183 = vector.broadcast %13 : vector<1x32xf32> to vector<16x32xf32>
    %184 = arith.addf %182, %183 : vector<16x32xf32>
    %185 = arith.cmpf one, %184, %184 : vector<16x32xf32>
    %cst_68 = arith.constant 0.000000e+00 : f32
    %186 = vector.broadcast %cst_68 : f32 to vector<16x32xf32>
    %187 = arith.select %185, %186, %184 : vector<16x32xi1>, vector<16x32xf32>
    %c0_i32_69 = arith.constant 0 : i32
    %188 = vector.broadcast %c0_i32_69 : i32 to vector<16x1xi32>
    %189 = arith.cmpi eq, %52, %188 : vector<16x1xi32>
    %cst_70 = arith.constant 0.000000e+00 : f32
    %190 = vector.shape_cast %189 : vector<16x1xi1> to vector<16x1xi1>
    %191 = vector.broadcast %190 : vector<16x1xi1> to vector<16x32xi1>
    %192 = vector.broadcast %cst_70 : f32 to vector<16x32xf32>
    %193 = arith.select %191, %192, %187 : vector<16x32xi1>, vector<16x32xf32>
    %cst_71 = arith.constant dense<0.000000e+00> : vector<16x32xf32>
    %194 = tpu.matmul %193, %5, %cst_71 {dimension_numbers = #tpu.dot_dimension_numbers<[1], [0], [0], [1], [0, 0, 1, 1], [], []>} : vector<16x32xf32>, vector<32x32xf32>, vector<16x32xf32> -> vector<16x32xf32>
    %195 = vector.broadcast %14 : vector<1x32xf32> to vector<16x32xf32>
    %196 = arith.addf %194, %195 : vector<16x32xf32>
    %197 = tpu.concatenate %193, %196 in 1 : vector<16x32xf32>, vector<16x32xf32> -> vector<16x64xf32>
    %c0_72 = arith.constant 0 : index
    %c0_73 = arith.constant 0 : index
    %198 = vector.load %arg4[%c0_72, %c0_73] : memref<16x64xf32, #tpu.memory_space<vmem>>, vector<16x64xf32>
    tpu.vector_store %arg4[%c0_72, %c0_73], %197 {strides = array<i32>} : memref<16x64xf32, #tpu.memory_space<vmem>>, vector<16x64xf32>,
    return
  }
  func.func @transform_0(%arg0: i32) -> i32 {
    %c0_i32 = arith.constant 0 : i32
    %c0_i32_0 = arith.constant 0 : i32
    return %c0_i32 : i32
  }
  func.func @transform_1(%arg0: i32) -> (i32, i32) {
    %c0_i32 = arith.constant 0 : i32
    %c0_i32_0 = arith.constant 0 : i32
    %c0_i32_1 = arith.constant 0 : i32
    return %c0_i32, %c0_i32_0 : i32, i32
  }
  func.func @transform_2(%arg0: i32) -> (i32, i32) {
    %c0_i32 = arith.constant 0 : i32
    %c0_i32_0 = arith.constant 0 : i32
    %c0_i32_1 = arith.constant 0 : i32
    return %c0_i32, %c0_i32_0 : i32, i32
  }
  func.func @transform_3(%arg0: i32) -> (i32, i32) {
    %c0_i32 = arith.constant 0 : i32
    %c0_i32_0 = arith.constant 0 : i32
    %c0_i32_1 = arith.constant 0 : i32
    return %c0_i32, %c0_i32_0 : i32, i32
  }
}

</mosaic_0001>

<llo_original>
// kernel: transformer_encoder_forward.1
$region0: #{transformer_encoder_forward.1}
  #allocation0 [shape = 'u32[]', space=smem, size = 0x4, offset = 0x4, fixed_abs, tag = 'smem constant byte address 0x4 - core index']
  #allocation1 [shape = 'u32[144,128]{1,0:T(1,128)}', space=vmem, size = 0x12000, scoped, tag = 'internal scratch']
  #allocation2 [shape = 'f32[16,32]{1,0:T(8,128)}', space=vmem, size = 0x2000, scoped, tag = 'scratch operand']
  %s0 = inlined_call_operand.vmem [shape: s32[2], index: 0, kind: input, shape index: {}]
  %s1 = inlined_call_operand.vmem [shape: f32[16,32], index: 1, kind: input, shape index: {}]
  %s2 = inlined_call_operand.hbm [shape: f32[208,128], index: 2, kind: input, shape index: {}]
  %s3 = inlined_call_operand.vmem [shape: f32[16,64], index: 3, kind: output, shape index: {}]
  %s4 = sld [smem:[#allocation0]]
  $region30: #{transformer_encoder_forward.1} parent=0
    _
  %s6 = ssub.s32 1, %s4
  %s7 = scalar_select 0, %s6, %s4
  $region1: #{transformer_encoder_forward.1} parent=0
    #allocation3 [shape = 'u8[512]{0}', space=smem, size = 0x200, scoped, tag = 'input window, operand 0, single buffered']
    #allocation4 [shape = 's32[1]{0}', space=sflag, size = 0x4, scoped, tag = 'scoped memory for transformer_encoder_forward.1']
    #allocation5 [shape = 's32[1]{0}', space=sflag, size = 0x4, scoped, tag = 'scoped memory for transformer_encoder_forward.1']
    #allocation6 [shape = 'u8[106496]{0}', space=vmem, size = 0x1a000, scoped, tag = 'input window, operand 2, single buffered']
    %8 = vsyncpa [#allocation5], 0
    %9 = vsyncpa [#allocation4], 0
    // Predicated region
    $region2: #{transformer_encoder_forward.1} parent=1 // pred_check
      _
    $region3: #{transformer_encoder_forward.1} parent=1 // pred_check_branch
      %11 = sbr.rel (0) target = $region5
    $region4: #{transformer_encoder_forward.1} parent=1 // pred_region
      %s13 = ssub.s32 16, 16
      %14 = vsyncadd [#allocation5], %s13
      %s16 = sshll.u32 %s0, 4
      %s17 = int_to_ptr.vmem [resolvable:$true] %s16
      %19 = dma.vmem_to_smem %s17, 16, [#allocation3], [#allocation5]
    $region5: #{transformer_encoder_forward.1} parent=1 // pred_fallthru
      _
    // Predicated region
    $region6: #{transformer_encoder_forward.1} parent=1 // pred_check
      _
    $region7: #{transformer_encoder_forward.1} parent=1 // pred_check_branch
      %21 = sbr.rel (0) target = $region9
    $region8: #{transformer_encoder_forward.1} parent=1 // pred_region
      _
    $region9: #{transformer_encoder_forward.1} parent=1 // pred_fallthru
      _
    // Predicated region
    $region10: #{transformer_encoder_forward.1} parent=1 // pred_check
      _
    $region11: #{transformer_encoder_forward.1} parent=1 // pred_check_branch
      %23 = sbr.rel (0) target = $region13
    $region12: #{transformer_encoder_forward.1} parent=1 // pred_region
      %s25 = ssub.s32 3328, 3328
      %26 = vsyncadd [#allocation4], %s25
      %s27 = sshll.u32 [#allocation6], 4
      %s28 = int_to_ptr.vmem [resolvable:$true] %s27
      %33 = dma.hbm_to_vmem [thread:$0]  %s2, 3328, %s28, [#allocation4], 128, 128, 8
    $region13: #{transformer_encoder_forward.1} parent=1 // pred_fallthru
      _
    // Predicated region
    $region14: #{transformer_encoder_forward.1} parent=1 // pred_check
      _
    $region15: #{transformer_encoder_forward.1} parent=1 // pred_check_branch
      %35 = sbr.rel (0) target = $region17
    $region16: #{transformer_encoder_forward.1} parent=1 // pred_region
      %36 = dma.done [#allocation5], 16
    $region17: #{transformer_encoder_forward.1} parent=1 // pred_fallthru
      _
    // Predicated region
    $region18: #{transformer_encoder_forward.1} parent=1 // pred_check
      _
    $region19: #{transformer_encoder_forward.1} parent=1 // pred_check_branch
      %38 = sbr.rel (0) target = $region21
    $region20: #{transformer_encoder_forward.1} parent=1 // pred_region
      %39 = dma.done [#allocation4], 3328
    $region21: #{transformer_encoder_forward.1} parent=1 // pred_fallthru
      _
    %40 = sfence
    %v41 = vld [vmem:[%s1] sm:$0xff]
    %v42 = vld [vmem:[%s1 + $0x8] sm:$0xff]
    %v43 = vld [vmem:[#allocation6] sm:$0xff]
    %v44 = vld [vmem:[#allocation6 + $0x8] sm:$0xff]
    %v45 = vld [vmem:[#allocation6 + $0x10] sm:$0xff]
    %v46 = vld [vmem:[#allocation6 + $0x18] sm:$0xff]
    %v47 = vld [vmem:[#allocation6 + $0x20] sm:$0xff]
    %v48 = vld [vmem:[#allocation6 + $0x28] sm:$0xff]
    %v49 = vld [vmem:[#allocation6 + $0x30] sm:$0xff]
    %v50 = vld [vmem:[#allocation6 + $0x38] sm:$0xff]
    %v51 = vld [vmem:[#allocation6 + $0x40] sm:$0xff]
    %v52 = vld [vmem:[#allocation6 + $0x48] sm:$0xff]
    %v53 = vld [vmem:[#allocation6 + $0x50] sm:$0xff]
    %v54 = vld [vmem:[#allocation6 + $0x58] sm:$0xff]
    %v55 = vld [vmem:[#allocation6 + $0x60] sm:$0xff]
    %v56 = vld [vmem:[#allocation6 + $0x68] sm:$0xff]
    %v57 = vld [vmem:[#allocation6 + $0x70] sm:$0xff]
    %v58 = vld [vmem:[#allocation6 + $0x78] sm:$0xff]
    %v59 = vld [vmem:[#allocation6 + $0x80] sm:$0xff]
    %v60 = vld [vmem:[#allocation6 + $0x88] sm:$0xff]
    %v61 = vld [vmem:[#allocation6 + $0x90] sm:$0xff]
    %v62 = vld [vmem:[#allocation6 + $0x98] sm:$0xff]
    %v63 = vld [vmem:[#allocation6 + $0xa0] sm:$0xff]
    %v64 = vld [vmem:[#allocation6 + $0xa8] sm:$0xff]
    %v65 = vld [vmem:[#allocation6 + $0xb0] sm:$0xff]
    %v66 = vld [vmem:[#allocation6 + $0xb8] sm:$0xff]
    %v67 = vld [vmem:[#allocation6 + $0xc0] sm:$0x1]
    %v68 = vld [vmem:[#allocation6 + $0xc1] sm:$0x1]
    %v69 = vld [vmem:[#allocation6 + $0xc2] sm:$0x1]
    %v70 = vld [vmem:[#allocation6 + $0xc3] sm:$0x1]
    %v71 = vld [vmem:[#allocation6 + $0xc4] sm:$0x1]
    %v72 = vld [vmem:[#allocation6 + $0xc5] sm:$0x1]
    %v73 = vld [vmem:[#allocation6 + $0xc6] sm:$0x1]
    %v74 = vld [vmem:[#allocation6 + $0xc7] sm:$0x1]
    %v75 = vld [vmem:[#allocation6 + $0xc8] sm:$0x1]
    %v76 = vlaneseq
    %v77 = vshrl.u32 %v76, 7
    %v78 = vsub.s32 0, %v77
    %v79 = vrot.slane %v67, %v78
    %vm80 = vcmask 261120
    %v82 = vsel %vm80, %v41, 0
    %v85 = vsel %vm80, %v42, 0
    %87 = vmatprep.subr.mxu0 0.0
    %88 = vmatpush1.msra.mxu0 %v43
    %89 = vmatprep.subr.mxu0 0.0
    %90 = vmatpush1.msra.mxu0 %v44
    %91 = vmatprep.subr.mxu0 0.0
    %92 = vmatpush1.msra.mxu0 %v45
    %93 = vmatprep.subr.mxu0 0.0
    %94 = vmatpush1.msra.mxu0 %v46
    %95 = vmatprep.subr.mxu0 0.0
    %96 = vmatpush1.msra.mxu0 0.0
    %97 = vmatprep.subr.mxu0 0.0
    %98 = vmatpush1.msra.mxu0 0.0
    %99 = vmatprep.subr.mxu0 0.0
    %100 = vmatpush1.msra.mxu0 0.0
    %101 = vmatprep.subr.mxu0 0.0
    %102 = vmatpush1.msra.mxu0 0.0
    %103 = vmatprep.subr.mxu0 0.0
    %104 = vmatpush1.msra.mxu0 0.0
    %105 = vmatprep.subr.mxu0 0.0
    %106 = vmatpush1.msra.mxu0 0.0
    %107 = vmatprep.subr.mxu0 0.0
    %108 = vmatpush1.msra.mxu0 0.0
    %109 = vmatprep.subr.mxu0 0.0
    %110 = vmatpush1.msra.mxu0 0.0
    %111 = vmatprep.subr.mxu0 0.0
    %112 = vmatpush1.msra.mxu0 0.0
    %113 = vmatprep.subr.mxu0 0.0
    %114 = vmatpush1.msra.mxu0 0.0
    %115 = vmatprep.subr.mxu0 0.0
    %116 = vmatpush1.msra.mxu0 0.0
    %117 = vmatprep.subr.mxu0 0.0
    %118 = vmatpush1.msra.mxu0 0.0
    %119 = vmatprep.subr.mxu0 0.0
    %120 = vmatpush1.msra.mxu0 0.0
    %121 = vmatprep.subr.mxu0 0.0
    %122 = vmatpush1.msra.mxu0 0.0
    %123 = vmatprep.subr.mxu0 0.0
    %124 = vmatpush1.msra.mxu0 0.0
    %125 = vmatprep.subr.mxu0 0.0
    %126 = vmatpush1.msra.mxu0 0.0
    %127 = vmatprep.subr.mxu0 0.0
    %128 = vmatpush1.msra.mxu0 0.0
    %129 = vmatprep.subr.mxu0 0.0
    %130 = vmatpush1.msra.mxu0 0.0
    %131 = vmatprep.subr.mxu0 0.0
    %132 = vmatpush1.msra.mxu0 0.0
    %133 = vmatprep.subr.mxu0 0.0
    %134 = vmatpush1.msra.mxu0 0.0
    %135 = vmatprep.subr.mxu0 0.0
    %136 = vmatpush1.msra.mxu0 0.0
    %137 = vmatprep.subr.mxu0 0.0
    %138 = vmatpush1.msra.mxu0 0.0
    %139 = vmatprep.subr.mxu0 0.0
    %140 = vmatpush1.msra.mxu0 0.0
    %141 = vmatprep.subr.mxu0 0.0
    %142 = vmatpush1.msra.mxu0 0.0
    %143 = vmatprep.subr.mxu0 0.0
    %144 = vmatpush1.msra.mxu0 0.0
    %145 = vmatprep.subr.mxu0 0.0
    %146 = vmatpush1.msra.mxu0 0.0
    %147 = vmatprep.subr.mxu0 0.0
    %148 = vmatpush1.msra.mxu0 0.0
    %149 = vmatprep.subr.mxu0 0.0
    %150 = vmatpush1.msra.mxu0 0.0
    %151 = vmatprep.mubr.f32.mxu0 0.0
    %152 = vmatmul.mubr.f32.gmra.mrb[0].mxu0 %v82
    %v153 = vpop.f32.mrb[0].mxu0
    %v154 = vadd.f32 %v79, %v153
    %v155 = vpop.f32.mrb[0].mxu0
    %156 = vmatprep.mubr.f32.mxu0 0.0
    %157 = vmatmul.mubr.f32.gmra.mrb[0].mxu0 %v85
    %v158 = vpop.f32.mrb[0].mxu0
    %v159 = vadd.f32 %v79, %v158
    %v160 = vpop.f32.mrb[0].mxu0
    %161 = vdwg.mxu0
    %v162 = vmul.f32 %v154, 0.35355338
    %v163 = vmul.f32 %v159, 0.35355338
    %v164 = vlaneseq
    %v165 = vand.u32 %v164, 127
    %v166 = vlaneseq
    %v167 = vshrl.u32 %v166, 7
    %v168 = vadd.s32 %v167, 8
    %v169 = vand.u32 %v165, 1
    %v170 = vshra.s32 %v165, 1
    %v171 = vand.u32 %v167, 1
    %v172 = vand.u32 %v168, 1
    %vm173 = vcmp.eq.s32.totalorder %v169, 0
    %s174 = sld [smem:[#allocation3]]
    %v175 = vstv %s174
    %v176 = vsel %vm173, %v175, 0
    %vm177 = vcmp.eq.s32.totalorder %v171, 0
    %vm178 = vcmp.eq.s32.totalorder %v172, 0
    %v179 = vsel %vm177, %v175, 0
    %v180 = vsel %vm178, %v175, 0
    %vm181 = vcmp.eq.s32.totalorder %v169, 1
    %s182 = sld [smem:[#allocation3 + $0x1]]
    %v183 = vstv %s182
    %v184 = vsel %vm181, %v183, %v176
    %vm185 = vcmp.eq.s32.totalorder %v171, 1
    %vm186 = vcmp.eq.s32.totalorder %v172, 1
    %v187 = vsel %vm185, %v183, %v179
    %v188 = vsel %vm186, %v183, %v180
    %vm189 = vcmp.ne.s32.totalorder %v171, %v169
    %vm190 = vcmp.ne.s32.totalorder %v172, %v169
    %vm191 = vcmp.ge.s32.totalorder %v170, %v184
    %v192 = vsel %vm191, 1, 0
    %vm193 = vcmp.eq.s32.totalorder %v192, 1
    %vm194 = vmor %vm189, %vm193
    %vm195 = vmor %vm190, %vm193
    %198 = vrot.lane.b32.xlu0 %v154, 96
    %v199 = vpop.permute.xlu0 %198
    %200 = vrot.lane.b32.xlu0 %v159, 96
    %v201 = vpop.permute.xlu0 %200
    %vm202 = vcmask 64512
    %v204 = vsel %vm202, %v162, 0
    %v207 = vsel %vm202, %v163, 0
    %v209 = vsel %vm202, %v199, 0
    %v211 = vsel %vm202, %v201, 0
    %213 = vmatprep.subr.mxu0 0.0
    %214 = vmatpush1.xpose.msra.mxu0 %v209
    %215 = vmatprep.subr.mxu0 0.0
    %216 = vmatpush1.xpose.msra.mxu0 %v211
    %217 = vmatprep.subr.mxu0 0.0
    %218 = vmatpush1.xpose.msra.mxu0 0.0
    %219 = vmatprep.subr.mxu0 0.0
    %220 = vmatpush1.xpose.msra.mxu0 0.0
    %221 = vmatprep.subr.mxu0 0.0
    %222 = vmatpush1.xpose.msra.mxu0 0.0
    %223 = vmatprep.subr.mxu0 0.0
    %224 = vmatpush1.xpose.msra.mxu0 0.0
    %225 = vmatprep.subr.mxu0 0.0
    %226 = vmatpush1.xpose.msra.mxu0 0.0
    %227 = vmatprep.subr.mxu0 0.0
    %228 = vmatpush1.xpose.msra.mxu0 0.0
    %229 = vmatprep.subr.mxu0 0.0
    %230 = vmatpush1.xpose.msra.mxu0 0.0
    %231 = vmatprep.subr.mxu0 0.0
    %232 = vmatpush1.xpose.msra.mxu0 0.0
    %233 = vmatprep.subr.mxu0 0.0
    %234 = vmatpush1.xpose.msra.mxu0 0.0
    %235 = vmatprep.subr.mxu0 0.0
    %236 = vmatpush1.xpose.msra.mxu0 0.0
    %237 = vmatprep.subr.mxu0 0.0
    %238 = vmatpush1.xpose.msra.mxu0 0.0
    %239 = vmatprep.subr.mxu0 0.0
    %240 = vmatpush1.xpose.msra.mxu0 0.0
    %241 = vmatprep.subr.mxu0 0.0
    %242 = vmatpush1.xpose.msra.mxu0 0.0
    %243 = vmatprep.subr.mxu0 0.0
    %244 = vmatpush1.xpose.msra.mxu0 0.0
    %245 = vmatprep.subr.mxu0 0.0
    %246 = vmatpush1.xpose.msra.mxu0 0.0
    %247 = vmatprep.subr.mxu0 0.0
    %248 = vmatpush1.xpose.msra.mxu0 0.0
    %249 = vmatprep.subr.mxu0 0.0
    %250 = vmatpush1.xpose.msra.mxu0 0.0
    %251 = vmatprep.subr.mxu0 0.0
    %252 = vmatpush1.xpose.msra.mxu0 0.0
    %253 = vmatprep.subr.mxu0 0.0
    %254 = vmatpush1.xpose.msra.mxu0 0.0
    %255 = vmatprep.subr.mxu0 0.0
    %256 = vmatpush1.xpose.msra.mxu0 0.0
    %257 = vmatprep.subr.mxu0 0.0
    %258 = vmatpush1.xpose.msra.mxu0 0.0
    %259 = vmatprep.subr.mxu0 0.0
    %260 = vmatpush1.xpose.msra.mxu0 0.0
    %261 = vmatprep.subr.mxu0 0.0
    %262 = vmatpush1.xpose.msra.mxu0 0.0
    %263 = vmatprep.subr.mxu0 0.0
    %264 = vmatpush1.xpose.msra.mxu0 0.0
    %265 = vmatprep.subr.mxu0 0.0
    %266 = vmatpush1.xpose.msra.mxu0 0.0
    %267 = vmatprep.subr.mxu0 0.0
    %268 = vmatpush1.xpose.msra.mxu0 0.0
    %269 = vmatprep.subr.mxu0 0.0
    %270 = vmatpush1.xpose.msra.mxu0 0.0
    %271 = vmatprep.subr.mxu0 0.0
    %272 = vmatpush1.xpose.msra.mxu0 0.0
    %273 = vmatprep.subr.mxu0 0.0
    %274 = vmatpush1.xpose.msra.mxu0 0.0
    %275 = vmatprep.subr.mxu0 0.0
    %276 = vmatpush1.xpose.msra.mxu0 0.0
    %277 = vmatprep.mubr.f32.mxu0 0.0
    %278 = vmatmul.mubr.f32.gmra.mrb[0].mxu0 %v204
    %v279 = vpop.f32.mrb[0].mxu0
    %v280 = vadd.f32 0.0, %v279
    %v281 = vpop.f32.mrb[0].mxu0
    %282 = vmatprep.mubr.f32.mxu0 0.0
    %283 = vmatmul.mubr.f32.gmra.mrb[0].mxu0 %v207
    %v284 = vpop.f32.mrb[0].mxu0
    %v285 = vadd.f32 0.0, %v284
    %v286 = vpop.f32.mrb[0].mxu0
    %287 = vdwg.mxu0
    %v288 = vsel %vm194, -1e+30, %v280
    %v289 = vsel %vm195, -1e+30, %v285
    %vm290 = vcmask 130048
    %v291 = vsel %vm290, %v288, -inf
    %292 = vmax.xlane.f32.xlu0 %v291
    %v293 = vpop.xlane.xlu0 %292
    %v294 = vsel %vm290, %v289, -inf
    %295 = vmax.xlane.f32.xlu0 %v294
    %v296 = vpop.xlane.xlu0 %295
    %v297 = vsub.f32 %v288, %v293
    %v298 = vsub.f32 %v289, %v296
    %v299 = vmul.f32 %v297, 1.442695
    %v300 = vpow.pop %v299
    %v301 = vmul.f32 %v298, 1.442695
    %v302 = vpow.pop %v301
    %v303 = vsel %vm290, %v300, 0.0
    %304 = vadd.xlane.f32.xlu0 %v303
    %v305 = vpop.xlane.xlu0 %304
    %v306 = vsel %vm290, %v302, 0.0
    %307 = vadd.xlane.f32.xlu0 %v306
    %v308 = vpop.xlane.xlu0 %307
    %v309 = vrcp.pop %v305
    %v310 = vmul.f32 %v300, %v309
    %v311 = vrcp.pop %v308
    %v312 = vmul.f32 %v302, %v311
    %313 = vrot.lane.b32.xlu0 %v154, 64
    %v314 = vpop.permute.xlu0 %313
    %315 = vrot.lane.b32.xlu0 %v159, 64
    %v316 = vpop.permute.xlu0 %315
    %v320 = vsel %vm290, %v310, 0
    %v323 = vsel %vm290, %v312, 0
    %325 = vmatprep.subr.mxu0 0.0
    %326 = vmatpush1.msra.mxu0 %v314
    %327 = vmatprep.subr.mxu0 0.0
    %328 = vmatpush1.msra.mxu0 %v316
    %329 = vmatprep.subr.mxu0 0.0
    %330 = vmatpush1.msra.mxu0 0.0
    %331 = vmatprep.subr.mxu0 0.0
    %332 = vmatpush1.msra.mxu0 0.0
    %333 = vmatprep.subr.mxu0 0.0
    %334 = vmatpush1.msra.mxu0 0.0
    %335 = vmatprep.subr.mxu0 0.0
    %336 = vmatpush1.msra.mxu0 0.0
    %337 = vmatprep.subr.mxu0 0.0
    %338 = vmatpush1.msra.mxu0 0.0
    %339 = vmatprep.subr.mxu0 0.0
    %340 = vmatpush1.msra.mxu0 0.0
    %341 = vmatprep.subr.mxu0 0.0
    %342 = vmatpush1.msra.mxu0 0.0
    %343 = vmatprep.subr.mxu0 0.0
    %344 = vmatpush1.msra.mxu0 0.0
    %345 = vmatprep.subr.mxu0 0.0
    %346 = vmatpush1.msra.mxu0 0.0
    %347 = vmatprep.subr.mxu0 0.0
    %348 = vmatpush1.msra.mxu0 0.0
    %349 = vmatprep.subr.mxu0 0.0
    %350 = vmatpush1.msra.mxu0 0.0
    %351 = vmatprep.subr.mxu0 0.0
    %352 = vmatpush1.msra.mxu0 0.0
    %353 = vmatprep.subr.mxu0 0.0
    %354 = vmatpush1.msra.mxu0 0.0
    %355 = vmatprep.subr.mxu0 0.0
    %356 = vmatpush1.msra.mxu0 0.0
    %357 = vmatprep.subr.mxu0 0.0
    %358 = vmatpush1.msra.mxu0 0.0
    %359 = vmatprep.subr.mxu0 0.0
    %360 = vmatpush1.msra.mxu0 0.0
    %361 = vmatprep.subr.mxu0 0.0
    %362 = vmatpush1.msra.mxu0 0.0
    %363 = vmatprep.subr.mxu0 0.0
    %364 = vmatpush1.msra.mxu0 0.0
    %365 = vmatprep.subr.mxu0 0.0
    %366 = vmatpush1.msra.mxu0 0.0
    %367 = vmatprep.subr.mxu0 0.0
    %368 = vmatpush1.msra.mxu0 0.0
    %369 = vmatprep.subr.mxu0 0.0
    %370 = vmatpush1.msra.mxu0 0.0
    %371 = vmatprep.subr.mxu0 0.0
    %372 = vmatpush1.msra.mxu0 0.0
    %373 = vmatprep.subr.mxu0 0.0
    %374 = vmatpush1.msra.mxu0 0.0
    %375 = vmatprep.subr.mxu0 0.0
    %376 = vmatpush1.msra.mxu0 0.0
    %377 = vmatprep.subr.mxu0 0.0
    %378 = vmatpush1.msra.mxu0 0.0
    %379 = vmatprep.subr.mxu0 0.0
    %380 = vmatpush1.msra.mxu0 0.0
    %381 = vmatprep.subr.mxu0 0.0
    %382 = vmatpush1.msra.mxu0 0.0
    %383 = vmatprep.subr.mxu0 0.0
    %384 = vmatpush1.msra.mxu0 0.0
    %385 = vmatprep.subr.mxu0 0.0
    %386 = vmatpush1.msra.mxu0 0.0
    %387 = vmatprep.subr.mxu0 0.0
    %388 = vmatpush1.msra.mxu0 0.0
    %389 = vmatprep.mubr.f32.mxu0 0.0
    %390 = vmatmul.mubr.f32.gmra.mrb[0].mxu0 %v320
    %v391 = vpop.f32.mrb[0].mxu0
    %v392 = vadd.f32 0.0, %v391
    %v393 = vpop.f32.mrb[0].mxu0
    %394 = vmatprep.mubr.f32.mxu0 0.0
    %395 = vmatmul.mubr.f32.gmra.mrb[0].mxu0 %v323
    %v396 = vpop.f32.mrb[0].mxu0
    %v397 = vadd.f32 0.0, %v396
    %v398 = vpop.f32.mrb[0].mxu0
    %399 = vdwg.mxu0
    %400 = vst.msk [vmem:[#allocation2] sm:$0xff] %vm202, %v392
    %401 = vst.msk [vmem:[#allocation2 + $0x8] sm:$0xff] %vm202, %v397
    %402 = vrot.lane.b32.xlu0 %v162, 120
    %v403 = vpop.permute.xlu0 %402
    %404 = vrot.lane.b32.xlu0 %v163, 120
    %v405 = vpop.permute.xlu0 %404
    %406 = vrot.lane.b32.xlu0 %v154, 88
    %v407 = vpop.permute.xlu0 %406
    %408 = vrot.lane.b32.xlu0 %v159, 88
    %v409 = vpop.permute.xlu0 %408
    %v410 = vsel %vm202, %v403, 0
    %v412 = vsel %vm202, %v405, 0
    %v414 = vsel %vm202, %v407, 0
    %v416 = vsel %vm202, %v409, 0
    %418 = vmatprep.subr.mxu0 0.0
    %419 = vmatpush1.xpose.msra.mxu0 %v414
    %420 = vmatprep.subr.mxu0 0.0
    %421 = vmatpush1.xpose.msra.mxu0 %v416
    %422 = vmatprep.subr.mxu0 0.0
    %423 = vmatpush1.xpose.msra.mxu0 0.0
    %424 = vmatprep.subr.mxu0 0.0
    %425 = vmatpush1.xpose.msra.mxu0 0.0
    %426 = vmatprep.subr.mxu0 0.0
    %427 = vmatpush1.xpose.msra.mxu0 0.0
    %428 = vmatprep.subr.mxu0 0.0
    %429 = vmatpush1.xpose.msra.mxu0 0.0
    %430 = vmatprep.subr.mxu0 0.0
    %431 = vmatpush1.xpose.msra.mxu0 0.0
    %432 = vmatprep.subr.mxu0 0.0
    %433 = vmatpush1.xpose.msra.mxu0 0.0
    %434 = vmatprep.subr.mxu0 0.0
    %435 = vmatpush1.xpose.msra.mxu0 0.0
    %436 = vmatprep.subr.mxu0 0.0
    %437 = vmatpush1.xpose.msra.mxu0 0.0
    %438 = vmatprep.subr.mxu0 0.0
    %439 = vmatpush1.xpose.msra.mxu0 0.0
    %440 = vmatprep.subr.mxu0 0.0
    %441 = vmatpush1.xpose.msra.mxu0 0.0
    %442 = vmatprep.subr.mxu0 0.0
    %443 = vmatpush1.xpose.msra.mxu0 0.0
    %444 = vmatprep.subr.mxu0 0.0
    %445 = vmatpush1.xpose.msra.mxu0 0.0
    %446 = vmatprep.subr.mxu0 0.0
    %447 = vmatpush1.xpose.msra.mxu0 0.0
    %448 = vmatprep.subr.mxu0 0.0
    %449 = vmatpush1.xpose.msra.mxu0 0.0
    %450 = vmatprep.subr.mxu0 0.0
    %451 = vmatpush1.xpose.msra.mxu0 0.0
    %452 = vmatprep.subr.mxu0 0.0
    %453 = vmatpush1.xpose.msra.mxu0 0.0
    %454 = vmatprep.subr.mxu0 0.0
    %455 = vmatpush1.xpose.msra.mxu0 0.0
    %456 = vmatprep.subr.mxu0 0.0
    %457 = vmatpush1.xpose.msra.mxu0 0.0
    %458 = vmatprep.subr.mxu0 0.0
    %459 = vmatpush1.xpose.msra.mxu0 0.0
    %460 = vmatprep.subr.mxu0 0.0
    %461 = vmatpush1.xpose.msra.mxu0 0.0
    %462 = vmatprep.subr.mxu0 0.0
    %463 = vmatpush1.xpose.msra.mxu0 0.0
    %464 = vmatprep.subr.mxu0 0.0
    %465 = vmatpush1.xpose.msra.mxu0 0.0
    %466 = vmatprep.subr.mxu0 0.0
    %467 = vmatpush1.xpose.msra.mxu0 0.0
    %468 = vmatprep.subr.mxu0 0.0
    %469 = vmatpush1.xpose.msra.mxu0 0.0
    %470 = vmatprep.subr.mxu0 0.0
    %471 = vmatpush1.xpose.msra.mxu0 0.0
    %472 = vmatprep.subr.mxu0 0.0
    %473 = vmatpush1.xpose.msra.mxu0 0.0
    %474 = vmatprep.subr.mxu0 0.0
    %475 = vmatpush1.xpose.msra.mxu0 0.0
    %476 = vmatprep.subr.mxu0 0.0
    %477 = vmatpush1.xpose.msra.mxu0 0.0
    %478 = vmatprep.subr.mxu0 0.0
    %479 = vmatpush1.xpose.msra.mxu0 0.0
    %480 = vmatprep.subr.mxu0 0.0
    %481 = vmatpush1.xpose.msra.mxu0 0.0
    %482 = vmatprep.mubr.f32.mxu0 0.0
    %483 = vmatmul.mubr.f32.gmra.mrb[0].mxu0 %v410
    %v484 = vpop.f32.mrb[0].mxu0
    %v485 = vadd.f32 0.0, %v484
    %v486 = vpop.f32.mrb[0].mxu0
    %487 = vmatprep.mubr.f32.mxu0 0.0
    %488 = vmatmul.mubr.f32.gmra.mrb[0].mxu0 %v412
    %v489 = vpop.f32.mrb[0].mxu0
    %v490 = vadd.f32 0.0, %v489
    %v491 = vpop.f32.mrb[0].mxu0
    %492 = vdwg.mxu0
    %v493 = vsel %vm194, -1e+30, %v485
    %v494 = vsel %vm195, -1e+30, %v490
    %v495 = vsel %vm290, %v493, -inf
    %496 = vmax.xlane.f32.xlu0 %v495
    %v497 = vpop.xlane.xlu0 %496
    %v498 = vsel %vm290, %v494, -inf
    %499 = vmax.xlane.f32.xlu0 %v498
    %v500 = vpop.xlane.xlu0 %499
    %v501 = vsub.f32 %v493, %v497
    %v502 = vsub.f32 %v494, %v500
    %v503 = vmul.f32 %v501, 1.442695
    %v504 = vpow.pop %v503
    %v505 = vmul.f32 %v502, 1.442695
    %v506 = vpow.pop %v505
    %v507 = vsel %vm290, %v504, 0.0
    %508 = vadd.xlane.f32.xlu0 %v507
    %v509 = vpop.xlane.xlu0 %508
    %v510 = vsel %vm290, %v506, 0.0
    %511 = vadd.xlane.f32.xlu0 %v510
    %v512 = vpop.xlane.xlu0 %511
    %v513 = vrcp.pop %v509
    %v514 = vmul.f32 %v504, %v513
    %v515 = vrcp.pop %v512
    %v516 = vmul.f32 %v506, %v515
    %517 = vrot.lane.b32.xlu0 %v154, 56
    %v518 = vpop.permute.xlu0 %517
    %519 = vrot.lane.b32.xlu0 %v159, 56
    %v520 = vpop.permute.xlu0 %519
    %v524 = vsel %vm290, %v514, 0
    %v527 = vsel %vm290, %v516, 0
    %529 = vmatprep.subr.mxu0 0.0
    %530 = vmatpush1.msra.mxu0 %v518
    %531 = vmatprep.subr.mxu0 0.0
    %532 = vmatpush1.msra.mxu0 %v520
    %533 = vmatprep.subr.mxu0 0.0
    %534 = vmatpush1.msra.mxu0 0.0
    %535 = vmatprep.subr.mxu0 0.0
    %536 = vmatpush1.msra.mxu0 0.0
    %537 = vmatprep.subr.mxu0 0.0
    %538 = vmatpush1.msra.mxu0 0.0
    %539 = vmatprep.subr.mxu0 0.0
    %540 = vmatpush1.msra.mxu0 0.0
    %541 = vmatprep.subr.mxu0 0.0
    %542 = vmatpush1.msra.mxu0 0.0
    %543 = vmatprep.subr.mxu0 0.0
    %544 = vmatpush1.msra.mxu0 0.0
    %545 = vmatprep.subr.mxu0 0.0
    %546 = vmatpush1.msra.mxu0 0.0
    %547 = vmatprep.subr.mxu0 0.0
    %548 = vmatpush1.msra.mxu0 0.0
    %549 = vmatprep.subr.mxu0 0.0
    %550 = vmatpush1.msra.mxu0 0.0
    %551 = vmatprep.subr.mxu0 0.0
    %552 = vmatpush1.msra.mxu0 0.0
    %553 = vmatprep.subr.mxu0 0.0
    %554 = vmatpush1.msra.mxu0 0.0
    %555 = vmatprep.subr.mxu0 0.0
    %556 = vmatpush1.msra.mxu0 0.0
    %557 = vmatprep.subr.mxu0 0.0
    %558 = vmatpush1.msra.mxu0 0.0
    %559 = vmatprep.subr.mxu0 0.0
    %560 = vmatpush1.msra.mxu0 0.0
    %561 = vmatprep.subr.mxu0 0.0
    %562 = vmatpush1.msra.mxu0 0.0
    %563 = vmatprep.subr.mxu0 0.0
    %564 = vmatpush1.msra.mxu0 0.0
    %565 = vmatprep.subr.mxu0 0.0
    %566 = vmatpush1.msra.mxu0 0.0
    %567 = vmatprep.subr.mxu0 0.0
    %568 = vmatpush1.msra.mxu0 0.0
    %569 = vmatprep.subr.mxu0 0.0
    %570 = vmatpush1.msra.mxu0 0.0
    %571 = vmatprep.subr.mxu0 0.0
    %572 = vmatpush1.msra.mxu0 0.0
    %573 = vmatprep.subr.mxu0 0.0
    %574 = vmatpush1.msra.mxu0 0.0
    %575 = vmatprep.subr.mxu0 0.0
    %576 = vmatpush1.msra.mxu0 0.0
    %577 = vmatprep.subr.mxu0 0.0
    %578 = vmatpush1.msra.mxu0 0.0
    %579 = vmatprep.subr.mxu0 0.0
    %580 = vmatpush1.msra.mxu0 0.0
    %581 = vmatprep.subr.mxu0 0.0
    %582 = vmatpush1.msra.mxu0 0.0
    %583 = vmatprep.subr.mxu0 0.0
    %584 = vmatpush1.msra.mxu0 0.0
    %585 = vmatprep.subr.mxu0 0.0
    %586 = vmatpush1.msra.mxu0 0.0
    %587 = vmatprep.subr.mxu0 0.0
    %588 = vmatpush1.msra.mxu0 0.0
    %589 = vmatprep.subr.mxu0 0.0
    %590 = vmatpush1.msra.mxu0 0.0
    %591 = vmatprep.subr.mxu0 0.0
    %592 = vmatpush1.msra.mxu0 0.0
    %593 = vmatprep.mubr.f32.mxu0 0.0
    %594 = vmatmul.mubr.f32.gmra.mrb[0].mxu0 %v524
    %v595 = vpop.f32.mrb[0].mxu0
    %v596 = vadd.f32 0.0, %v595
    %v597 = vpop.f32.mrb[0].mxu0
    %598 = vmatprep.mubr.f32.mxu0 0.0
    %599 = vmatmul.mubr.f32.gmra.mrb[0].mxu0 %v527
    %v600 = vpop.f32.mrb[0].mxu0
    %v601 = vadd.f32 0.0, %v600
    %v602 = vpop.f32.mrb[0].mxu0
    %603 = vdwg.mxu0
    %606 = vrot.lane.b32.xlu0 %v596, 8
    %v607 = vpop.permute.xlu0 %606
    %608 = vrot.lane.b32.xlu0 %v601, 8
    %v609 = vpop.permute.xlu0 %608
    %vm612 = vcmask 130112
    %613 = vst.msk [vmem:[#allocation2] sm:$0xff] %vm612, %v607
    %614 = vst.msk [vmem:[#allocation2 + $0x8] sm:$0xff] %vm612, %v609
    %615 = vrot.lane.b32.xlu0 %v162, 112
    %v616 = vpop.permute.xlu0 %615
    %617 = vrot.lane.b32.xlu0 %v163, 112
    %v618 = vpop.permute.xlu0 %617
    %619 = vrot.lane.b32.xlu0 %v154, 80
    %v620 = vpop.permute.xlu0 %619
    %621 = vrot.lane.b32.xlu0 %v159, 80
    %v622 = vpop.permute.xlu0 %621
    %v623 = vsel %vm202, %v616, 0
    %v625 = vsel %vm202, %v618, 0
    %v627 = vsel %vm202, %v620, 0
    %v629 = vsel %vm202, %v622, 0
    %631 = vmatprep.subr.mxu0 0.0
    %632 = vmatpush1.xpose.msra.mxu0 %v627
    %633 = vmatprep.subr.mxu0 0.0
    %634 = vmatpush1.xpose.msra.mxu0 %v629
    %635 = vmatprep.subr.mxu0 0.0
    %636 = vmatpush1.xpose.msra.mxu0 0.0
    %637 = vmatprep.subr.mxu0 0.0
    %638 = vmatpush1.xpose.msra.mxu0 0.0
    %639 = vmatprep.subr.mxu0 0.0
    %640 = vmatpush1.xpose.msra.mxu0 0.0
    %641 = vmatprep.subr.mxu0 0.0
    %642 = vmatpush1.xpose.msra.mxu0 0.0
    %643 = vmatprep.subr.mxu0 0.0
    %644 = vmatpush1.xpose.msra.mxu0 0.0
    %645 = vmatprep.subr.mxu0 0.0
    %646 = vmatpush1.xpose.msra.mxu0 0.0
    %647 = vmatprep.subr.mxu0 0.0
    %648 = vmatpush1.xpose.msra.mxu0 0.0
    %649 = vmatprep.subr.mxu0 0.0
    %650 = vmatpush1.xpose.msra.mxu0 0.0
    %651 = vmatprep.subr.mxu0 0.0
    %652 = vmatpush1.xpose.msra.mxu0 0.0
    %653 = vmatprep.subr.mxu0 0.0
    %654 = vmatpush1.xpose.msra.mxu0 0.0
    %655 = vmatprep.subr.mxu0 0.0
    %656 = vmatpush1.xpose.msra.mxu0 0.0
    %657 = vmatprep.subr.mxu0 0.0
    %658 = vmatpush1.xpose.msra.mxu0 0.0
    %659 = vmatprep.subr.mxu0 0.0
    %660 = vmatpush1.xpose.msra.mxu0 0.0
    %661 = vmatprep.subr.mxu0 0.0
    %662 = vmatpush1.xpose.msra.mxu0 0.0
    %663 = vmatprep.subr.mxu0 0.0
    %664 = vmatpush1.xpose.msra.mxu0 0.0
    %665 = vmatprep.subr.mxu0 0.0
    %666 = vmatpush1.xpose.msra.mxu0 0.0
    %667 = vmatprep.subr.mxu0 0.0
    %668 = vmatpush1.xpose.msra.mxu0 0.0
    %669 = vmatprep.subr.mxu0 0.0
    %670 = vmatpush1.xpose.msra.mxu0 0.0
    %671 = vmatprep.subr.mxu0 0.0
    %672 = vmatpush1.xpose.msra.mxu0 0.0
    %673 = vmatprep.subr.mxu0 0.0
    %674 = vmatpush1.xpose.msra.mxu0 0.0
    %675 = vmatprep.subr.mxu0 0.0
    %676 = vmatpush1.xpose.msra.mxu0 0.0
    %677 = vmatprep.subr.mxu0 0.0
    %678 = vmatpush1.xpose.msra.mxu0 0.0
    %679 = vmatprep.subr.mxu0 0.0
    %680 = vmatpush1.xpose.msra.mxu0 0.0
    %681 = vmatprep.subr.mxu0 0.0
    %682 = vmatpush1.xpose.msra.mxu0 0.0
    %683 = vmatprep.subr.mxu0 0.0
    %684 = vmatpush1.xpose.msra.mxu0 0.0
    %685 = vmatprep.subr.mxu0 0.0
    %686 = vmatpush1.xpose.msra.mxu0 0.0
    %687 = vmatprep.subr.mxu0 0.0
    %688 = vmatpush1.xpose.msra.mxu0 0.0
    %689 = vmatprep.subr.mxu0 0.0
    %690 = vmatpush1.xpose.msra.mxu0 0.0
    %691 = vmatprep.subr.mxu0 0.0
    %692 = vmatpush1.xpose.msra.mxu0 0.0
    %693 = vmatprep.subr.mxu0 0.0
    %694 = vmatpush1.xpose.msra.mxu0 0.0
    %695 = vmatprep.mubr.f32.mxu0 0.0
    %696 = vmatmul.mubr.f32.gmra.mrb[0].mxu0 %v623
    %v697 = vpop.f32.mrb[0].mxu0
    %v698 = vadd.f32 0.0, %v697
    %v699 = vpop.f32.mrb[0].mxu0
    %700 = vmatprep.mubr.f32.mxu0 0.0
    %701 = vmatmul.mubr.f32.gmra.mrb[0].mxu0 %v625
    %v702 = vpop.f32.mrb[0].mxu0
    %v703 = vadd.f32 0.0, %v702
    %v704 = vpop.f32.mrb[0].mxu0
    %705 = vdwg.mxu0
    %v706 = vsel %vm194, -1e+30, %v698
    %v707 = vsel %vm195, -1e+30, %v703
    %v708 = vsel %vm290, %v706, -inf
    %709 = vmax.xlane.f32.xlu0 %v708
    %v710 = vpop.xlane.xlu0 %709
    %v711 = vsel %vm290, %v707, -inf
    %712 = vmax.xlane.f32.xlu0 %v711
    %v713 = vpop.xlane.xlu0 %712
    %v714 = vsub.f32 %v706, %v710
    %v715 = vsub.f32 %v707, %v713
    %v716 = vmul.f32 %v714, 1.442695
    %v717 = vpow.pop %v716
    %v718 = vmul.f32 %v715, 1.442695
    %v719 = vpow.pop %v718
    %v720 = vsel %vm290, %v717, 0.0
    %721 = vadd.xlane.f32.xlu0 %v720
    %v722 = vpop.xlane.xlu0 %721
    %v723 = vsel %vm290, %v719, 0.0
    %724 = vadd.xlane.f32.xlu0 %v723
    %v725 = vpop.xlane.xlu0 %724
    %v726 = vrcp.pop %v722
    %v727 = vmul.f32 %v717, %v726
    %v728 = vrcp.pop %v725
    %v729 = vmul.f32 %v719, %v728
    %730 = vrot.lane.b32.xlu0 %v154, 48
    %v731 = vpop.permute.xlu0 %730
    %732 = vrot.lane.b32.xlu0 %v159, 48
    %v733 = vpop.permute.xlu0 %732
    %v737 = vsel %vm290, %v727, 0
    %v740 = vsel %vm290, %v729, 0
    %742 = vmatprep.subr.mxu0 0.0
    %743 = vmatpush1.msra.mxu0 %v731
    %744 = vmatprep.subr.mxu0 0.0
    %745 = vmatpush1.msra.mxu0 %v733
    %746 = vmatprep.subr.mxu0 0.0
    %747 = vmatpush1.msra.mxu0 0.0
    %748 = vmatprep.subr.mxu0 0.0
    %749 = vmatpush1.msra.mxu0 0.0
    %750 = vmatprep.subr.mxu0 0.0
    %751 = vmatpush1.msra.mxu0 0.0
    %752 = vmatprep.subr.mxu0 0.0
    %753 = vmatpush1.msra.mxu0 0.0
    %754 = vmatprep.subr.mxu0 0.0
    %755 = vmatpush1.msra.mxu0 0.0
    %756 = vmatprep.subr.mxu0 0.0
    %757 = vmatpush1.msra.mxu0 0.0
    %758 = vmatprep.subr.mxu0 0.0
    %759 = vmatpush1.msra.mxu0 0.0
    %760 = vmatprep.subr.mxu0 0.0
    %761 = vmatpush1.msra.mxu0 0.0
    %762 = vmatprep.subr.mxu0 0.0
    %763 = vmatpush1.msra.mxu0 0.0
    %764 = vmatprep.subr.mxu0 0.0
    %765 = vmatpush1.msra.mxu0 0.0
    %766 = vmatprep.subr.mxu0 0.0
    %767 = vmatpush1.msra.mxu0 0.0
    %768 = vmatprep.subr.mxu0 0.0
    %769 = vmatpush1.msra.mxu0 0.0
    %770 = vmatprep.subr.mxu0 0.0
    %771 = vmatpush1.msra.mxu0 0.0
    %772 = vmatprep.subr.mxu0 0.0
    %773 = vmatpush1.msra.mxu0 0.0
    %774 = vmatprep.subr.mxu0 0.0
    %775 = vmatpush1.msra.mxu0 0.0
    %776 = vmatprep.subr.mxu0 0.0
    %777 = vmatpush1.msra.mxu0 0.0
    %778 = vmatprep.subr.mxu0 0.0
    %779 = vmatpush1.msra.mxu0 0.0
    %780 = vmatprep.subr.mxu0 0.0
    %781 = vmatpush1.msra.mxu0 0.0
    %782 = vmatprep.subr.mxu0 0.0
    %783 = vmatpush1.msra.mxu0 0.0
    %784 = vmatprep.subr.mxu0 0.0
    %785 = vmatpush1.msra.mxu0 0.0
    %786 = vmatprep.subr.mxu0 0.0
    %787 = vmatpush1.msra.mxu0 0.0
    %788 = vmatprep.subr.mxu0 0.0
    %789 = vmatpush1.msra.mxu0 0.0
    %790 = vmatprep.subr.mxu0 0.0
    %791 = vmatpush1.msra.mxu0 0.0
    %792 = vmatprep.subr.mxu0 0.0
    %793 = vmatpush1.msra.mxu0 0.0
    %794 = vmatprep.subr.mxu0 0.0
    %795 = vmatpush1.msra.mxu0 0.0
    %796 = vmatprep.subr.mxu0 0.0
    %797 = vmatpush1.msra.mxu0 0.0
    %798 = vmatprep.subr.mxu0 0.0
    %799 = vmatpush1.msra.mxu0 0.0
    %800 = vmatprep.subr.mxu0 0.0
    %801 = vmatpush1.msra.mxu0 0.0
    %802 = vmatprep.subr.mxu0 0.0
    %803 = vmatpush1.msra.mxu0 0.0
    %804 = vmatprep.subr.mxu0 0.0
    %805 = vmatpush1.msra.mxu0 0.0
    %806 = vmatprep.mubr.f32.mxu0 0.0
    %807 = vmatmul.mubr.f32.gmra.mrb[0].mxu0 %v737
    %v808 = vpop.f32.mrb[0].mxu0
    %v809 = vadd.f32 0.0, %v808
    %v810 = vpop.f32.mrb[0].mxu0
    %811 = vmatprep.mubr.f32.mxu0 0.0
    %812 = vmatmul.mubr.f32.gmra.mrb[0].mxu0 %v740
    %v813 = vpop.f32.mrb[0].mxu0
    %v814 = vadd.f32 0.0, %v813
    %v815 = vpop.f32.mrb[0].mxu0
    %816 = vdwg.mxu0
    %819 = vrot.lane.b32.xlu0 %v809, 16
    %v820 = vpop.permute.xlu0 %819
    %821 = vrot.lane.b32.xlu0 %v814, 16
    %v822 = vpop.permute.xlu0 %821
    %vm825 = vcmask 195712
    %826 = vst.msk [vmem:[#allocation2] sm:$0xff] %vm825, %v820
    %827 = vst.msk [vmem:[#allocation2 + $0x8] sm:$0xff] %vm825, %v822
    %828 = vrot.lane.b32.xlu0 %v162, 104
    %v829 = vpop.permute.xlu0 %828
    %830 = vrot.lane.b32.xlu0 %v163, 104
    %v831 = vpop.permute.xlu0 %830
    %832 = vrot.lane.b32.xlu0 %v154, 72
    %v833 = vpop.permute.xlu0 %832
    %834 = vrot.lane.b32.xlu0 %v159, 72
    %v835 = vpop.permute.xlu0 %834
    %v836 = vsel %vm202, %v829, 0
    %v838 = vsel %vm202, %v831, 0
    %v840 = vsel %vm202, %v833, 0
    %v842 = vsel %vm202, %v835, 0
    %844 = vmatprep.subr.mxu0 0.0
    %845 = vmatpush1.xpose.msra.mxu0 %v840
    %846 = vmatprep.subr.mxu0 0.0
    %847 = vmatpush1.xpose.msra.mxu0 %v842
    %848 = vmatprep.subr.mxu0 0.0
    %849 = vmatpush1.xpose.msra.mxu0 0.0
    %850 = vmatprep.subr.mxu0 0.0
    %851 = vmatpush1.xpose.msra.mxu0 0.0
    %852 = vmatprep.subr.mxu0 0.0
    %853 = vmatpush1.xpose.msra.mxu0 0.0
    %854 = vmatprep.subr.mxu0 0.0
    %855 = vmatpush1.xpose.msra.mxu0 0.0
    %856 = vmatprep.subr.mxu0 0.0
    %857 = vmatpush1.xpose.msra.mxu0 0.0
    %858 = vmatprep.subr.mxu0 0.0
    %859 = vmatpush1.xpose.msra.mxu0 0.0
    %860 = vmatprep.subr.mxu0 0.0
    %861 = vmatpush1.xpose.msra.mxu0 0.0
    %862 = vmatprep.subr.mxu0 0.0
    %863 = vmatpush1.xpose.msra.mxu0 0.0
    %864 = vmatprep.subr.mxu0 0.0
    %865 = vmatpush1.xpose.msra.mxu0 0.0
    %866 = vmatprep.subr.mxu0 0.0
    %867 = vmatpush1.xpose.msra.mxu0 0.0
    %868 = vmatprep.subr.mxu0 0.0
    %869 = vmatpush1.xpose.msra.mxu0 0.0
    %870 = vmatprep.subr.mxu0 0.0
    %871 = vmatpush1.xpose.msra.mxu0 0.0
    %872 = vmatprep.subr.mxu0 0.0
    %873 = vmatpush1.xpose.msra.mxu0 0.0
    %874 = vmatprep.subr.mxu0 0.0
    %875 = vmatpush1.xpose.msra.mxu0 0.0
    %876 = vmatprep.subr.mxu0 0.0
    %877 = vmatpush1.xpose.msra.mxu0 0.0
    %878 = vmatprep.subr.mxu0 0.0
    %879 = vmatpush1.xpose.msra.mxu0 0.0
    %880 = vmatprep.subr.mxu0 0.0
    %881 = vmatpush1.xpose.msra.mxu0 0.0
    %882 = vmatprep.subr.mxu0 0.0
    %883 = vmatpush1.xpose.msra.mxu0 0.0
    %884 = vmatprep.subr.mxu0 0.0
    %885 = vmatpush1.xpose.msra.mxu0 0.0
    %886 = vmatprep.subr.mxu0 0.0
    %887 = vmatpush1.xpose.msra.mxu0 0.0
    %888 = vmatprep.subr.mxu0 0.0
    %889 = vmatpush1.xpose.msra.mxu0 0.0
    %890 = vmatprep.subr.mxu0 0.0
    %891 = vmatpush1.xpose.msra.mxu0 0.0
    %892 = vmatprep.subr.mxu0 0.0
    %893 = vmatpush1.xpose.msra.mxu0 0.0
    %894 = vmatprep.subr.mxu0 0.0
    %895 = vmatpush1.xpose.msra.mxu0 0.0
    %896 = vmatprep.subr.mxu0 0.0
    %897 = vmatpush1.xpose.msra.mxu0 0.0
    %898 = vmatprep.subr.mxu0 0.0
    %899 = vmatpush1.xpose.msra.mxu0 0.0
    %900 = vmatprep.subr.mxu0 0.0
    %901 = vmatpush1.xpose.msra.mxu0 0.0
    %902 = vmatprep.subr.mxu0 0.0
    %903 = vmatpush1.xpose.msra.mxu0 0.0
    %904 = vmatprep.subr.mxu0 0.0
    %905 = vmatpush1.xpose.msra.mxu0 0.0
    %906 = vmatprep.subr.mxu0 0.0
    %907 = vmatpush1.xpose.msra.mxu0 0.0
    %908 = vmatprep.mubr.f32.mxu0 0.0
    %909 = vmatmul.mubr.f32.gmra.mrb[0].mxu0 %v836
    %v910 = vpop.f32.mrb[0].mxu0
    %v911 = vadd.f32 0.0, %v910
    %v912 = vpop.f32.mrb[0].mxu0
    %913 = vmatprep.mubr.f32.mxu0 0.0
    %914 = vmatmul.mubr.f32.gmra.mrb[0].mxu0 %v838
    %v915 = vpop.f32.mrb[0].mxu0
    %v916 = vadd.f32 0.0, %v915
    %v917 = vpop.f32.mrb[0].mxu0
    %918 = vdwg.mxu0
    %v919 = vsel %vm194, -1e+30, %v911
    %v920 = vsel %vm195, -1e+30, %v916
    %v921 = vsel %vm290, %v919, -inf
    %922 = vmax.xlane.f32.xlu0 %v921
    %v923 = vpop.xlane.xlu0 %922
    %v924 = vsel %vm290, %v920, -inf
    %925 = vmax.xlane.f32.xlu0 %v924
    %v926 = vpop.xlane.xlu0 %925
    %v927 = vsub.f32 %v919, %v923
    %v928 = vsub.f32 %v920, %v926
    %v929 = vmul.f32 %v927, 1.442695
    %v930 = vpow.pop %v929
    %v931 = vmul.f32 %v928, 1.442695
    %v932 = vpow.pop %v931
    %v933 = vsel %vm290, %v930, 0.0
    %934 = vadd.xlane.f32.xlu0 %v933
    %v935 = vpop.xlane.xlu0 %934
    %v936 = vsel %vm290, %v932, 0.0
    %937 = vadd.xlane.f32.xlu0 %v936
    %v938 = vpop.xlane.xlu0 %937
    %v939 = vrcp.pop %v935
    %v940 = vmul.f32 %v930, %v939
    %v941 = vrcp.pop %v938
    %v942 = vmul.f32 %v932, %v941
    %943 = vrot.lane.b32.xlu0 %v154, 40
    %v944 = vpop.permute.xlu0 %943
    %945 = vrot.lane.b32.xlu0 %v159, 40
    %v946 = vpop.permute.xlu0 %945
    %v950 = vsel %vm290, %v940, 0
    %v953 = vsel %vm290, %v942, 0
    %955 = vmatprep.subr.mxu0 0.0
    %956 = vmatpush1.msra.mxu0 %v944
    %957 = vmatprep.subr.mxu0 0.0
    %958 = vmatpush1.msra.mxu0 %v946
    %959 = vmatprep.subr.mxu0 0.0
    %960 = vmatpush1.msra.mxu0 0.0
    %961 = vmatprep.subr.mxu0 0.0
    %962 = vmatpush1.msra.mxu0 0.0
    %963 = vmatprep.subr.mxu0 0.0
    %964 = vmatpush1.msra.mxu0 0.0
    %965 = vmatprep.subr.mxu0 0.0
    %966 = vmatpush1.msra.mxu0 0.0
    %967 = vmatprep.subr.mxu0 0.0
    %968 = vmatpush1.msra.mxu0 0.0
    %969 = vmatprep.subr.mxu0 0.0
    %970 = vmatpush1.msra.mxu0 0.0
    %971 = vmatprep.subr.mxu0 0.0
    %972 = vmatpush1.msra.mxu0 0.0
    %973 = vmatprep.subr.mxu0 0.0
    %974 = vmatpush1.msra.mxu0 0.0
    %975 = vmatprep.subr.mxu0 0.0
    %976 = vmatpush1.msra.mxu0 0.0
    %977 = vmatprep.subr.mxu0 0.0
    %978 = vmatpush1.msra.mxu0 0.0
    %979 = vmatprep.subr.mxu0 0.0
    %980 = vmatpush1.msra.mxu0 0.0
    %981 = vmatprep.subr.mxu0 0.0
    %982 = vmatpush1.msra.mxu0 0.0
    %983 = vmatprep.subr.mxu0 0.0
    %984 = vmatpush1.msra.mxu0 0.0
    %985 = vmatprep.subr.mxu0 0.0
    %986 = vmatpush1.msra.mxu0 0.0
    %987 = vmatprep.subr.mxu0 0.0
    %988 = vmatpush1.msra.mxu0 0.0
    %989 = vmatprep.subr.mxu0 0.0
    %990 = vmatpush1.msra.mxu0 0.0
    %991 = vmatprep.subr.mxu0 0.0
    %992 = vmatpush1.msra.mxu0 0.0
    %993 = vmatprep.subr.mxu0 0.0
    %994 = vmatpush1.msra.mxu0 0.0
    %995 = vmatprep.subr.mxu0 0.0
    %996 = vmatpush1.msra.mxu0 0.0
    %997 = vmatprep.subr.mxu0 0.0
    %998 = vmatpush1.msra.mxu0 0.0
    %999 = vmatprep.subr.mxu0 0.0
    %1000 = vmatpush1.msra.mxu0 0.0
    %1001 = vmatprep.subr.mxu0 0.0
    %1002 = vmatpush1.msra.mxu0 0.0
    %1003 = vmatprep.subr.mxu0 0.0
    %1004 = vmatpush1.msra.mxu0 0.0
    %1005 = vmatprep.subr.mxu0 0.0
    %1006 = vmatpush1.msra.mxu0 0.0
    %1007 = vmatprep.subr.mxu0 0.0
    %1008 = vmatpush1.msra.mxu0 0.0
    %1009 = vmatprep.subr.mxu0 0.0
    %1010 = vmatpush1.msra.mxu0 0.0
    %1011 = vmatprep.subr.mxu0 0.0
    %1012 = vmatpush1.msra.mxu0 0.0
    %1013 = vmatprep.subr.mxu0 0.0
    %1014 = vmatpush1.msra.mxu0 0.0
    %1015 = vmatprep.subr.mxu0 0.0
    %1016 = vmatpush1.msra.mxu0 0.0
    %1017 = vmatprep.subr.mxu0 0.0
    %1018 = vmatpush1.msra.mxu0 0.0
    %1019 = vmatprep.mubr.f32.mxu0 0.0
    %1020 = vmatmul.mubr.f32.gmra.mrb[0].mxu0 %v950
    %v1021 = vpop.f32.mrb[0].mxu0
    %v1022 = vadd.f32 0.0, %v1021
    %v1023 = vpop.f32.mrb[0].mxu0
    %1024 = vmatprep.mubr.f32.mxu0 0.0
    %1025 = vmatmul.mubr.f32.gmra.mrb[0].mxu0 %v953
    %v1026 = vpop.f32.mrb[0].mxu0
    %v1027 = vadd.f32 0.0, %v1026
    %v1028 = vpop.f32.mrb[0].mxu0
    %1029 = vdwg.mxu0
    %1032 = vrot.lane.b32.xlu0 %v1022, 24
    %v1033 = vpop.permute.xlu0 %1032
    %1034 = vrot.lane.b32.xlu0 %v1027, 24
    %v1035 = vpop.permute.xlu0 %1034
    %vm1038 = vcmask 261312
    %1039 = vst.msk [vmem:[#allocation2] sm:$0xff] %vm1038, %v1033
    %1040 = vst.msk [vmem:[#allocation2 + $0x8] sm:$0xff] %vm1038, %v1035
    %v1041 = vld [vmem:[#allocation2] sm:$0xff]
    %v1042 = vld [vmem:[#allocation2 + $0x8] sm:$0xff]
    %v1043 = vlaneseq
    %v1044 = vshrl.u32 %v1043, 7
    %v1045 = vsub.s32 0, %v1044
    %v1046 = vrot.slane %v68, %v1045
    %v1048 = vsel %vm80, %v1041, 0
    %v1051 = vsel %vm80, %v1042, 0
    %1053 = vmatprep.subr.mxu0 0.0
    %1054 = vmatpush1.msra.mxu0 %v59
    %1055 = vmatprep.subr.mxu0 0.0
    %1056 = vmatpush1.msra.mxu0 %v60
    %1057 = vmatprep.subr.mxu0 0.0
    %1058 = vmatpush1.msra.mxu0 %v61
    %1059 = vmatprep.subr.mxu0 0.0
    %1060 = vmatpush1.msra.mxu0 %v62
    %1061 = vmatprep.subr.mxu0 0.0
    %1062 = vmatpush1.msra.mxu0 0.0
    %1063 = vmatprep.subr.mxu0 0.0
    %1064 = vmatpush1.msra.mxu0 0.0
    %1065 = vmatprep.subr.mxu0 0.0
    %1066 = vmatpush1.msra.mxu0 0.0
    %1067 = vmatprep.subr.mxu0 0.0
    %1068 = vmatpush1.msra.mxu0 0.0
    %1069 = vmatprep.subr.mxu0 0.0
    %1070 = vmatpush1.msra.mxu0 0.0
    %1071 = vmatprep.subr.mxu0 0.0
    %1072 = vmatpush1.msra.mxu0 0.0
    %1073 = vmatprep.subr.mxu0 0.0
    %1074 = vmatpush1.msra.mxu0 0.0
    %1075 = vmatprep.subr.mxu0 0.0
    %1076 = vmatpush1.msra.mxu0 0.0
    %1077 = vmatprep.subr.mxu0 0.0
    %1078 = vmatpush1.msra.mxu0 0.0
    %1079 = vmatprep.subr.mxu0 0.0
    %1080 = vmatpush1.msra.mxu0 0.0
    %1081 = vmatprep.subr.mxu0 0.0
    %1082 = vmatpush1.msra.mxu0 0.0
    %1083 = vmatprep.subr.mxu0 0.0
    %1084 = vmatpush1.msra.mxu0 0.0
    %1085 = vmatprep.subr.mxu0 0.0
    %1086 = vmatpush1.msra.mxu0 0.0
    %1087 = vmatprep.subr.mxu0 0.0
    %1088 = vmatpush1.msra.mxu0 0.0
    %1089 = vmatprep.subr.mxu0 0.0
    %1090 = vmatpush1.msra.mxu0 0.0
    %1091 = vmatprep.subr.mxu0 0.0
    %1092 = vmatpush1.msra.mxu0 0.0
    %1093 = vmatprep.subr.mxu0 0.0
    %1094 = vmatpush1.msra.mxu0 0.0
    %1095 = vmatprep.subr.mxu0 0.0
    %1096 = vmatpush1.msra.mxu0 0.0
    %1097 = vmatprep.subr.mxu0 0.0
    %1098 = vmatpush1.msra.mxu0 0.0
    %1099 = vmatprep.subr.mxu0 0.0
    %1100 = vmatpush1.msra.mxu0 0.0
    %1101 = vmatprep.subr.mxu0 0.0
    %1102 = vmatpush1.msra.mxu0 0.0
    %1103 = vmatprep.subr.mxu0 0.0
    %1104 = vmatpush1.msra.mxu0 0.0
    %1105 = vmatprep.subr.mxu0 0.0
    %1106 = vmatpush1.msra.mxu0 0.0
    %1107 = vmatprep.subr.mxu0 0.0
    %1108 = vmatpush1.msra.mxu0 0.0
    %1109 = vmatprep.subr.mxu0 0.0
    %1110 = vmatpush1.msra.mxu0 0.0
    %1111 = vmatprep.subr.mxu0 0.0
    %1112 = vmatpush1.msra.mxu0 0.0
    %1113 = vmatprep.subr.mxu0 0.0
    %1114 = vmatpush1.msra.mxu0 0.0
    %1115 = vmatprep.subr.mxu0 0.0
    %1116 = vmatpush1.msra.mxu0 0.0
    %1117 = vmatprep.mubr.f32.mxu0 0.0
    %1118 = vmatmul.mubr.f32.gmra.mrb[0].mxu0 %v1048
    %v1119 = vpop.f32.mrb[0].mxu0
    %v1120 = vadd.f32 %v1046, %v1119
    %v1121 = vpop.f32.mrb[0].mxu0
    %1122 = vmatprep.mubr.f32.mxu0 0.0
    %1123 = vmatmul.mubr.f32.gmra.mrb[0].mxu0 %v1051
    %v1124 = vpop.f32.mrb[0].mxu0
    %v1125 = vadd.f32 %v1046, %v1124
    %v1126 = vpop.f32.mrb[0].mxu0
    %1127 = vdwg.mxu0
    %v1128 = vadd.f32 %v41, %v1120
    %v1129 = vadd.f32 %v42, %v1125
    %v1130 = vsel %vm80, %v1128, 0.0
    %1131 = vadd.xlane.f32.xlu0 %v1130
    %v1132 = vpop.xlane.xlu0 %1131
    %v1133 = vsel %vm80, %v1129, 0.0
    %1134 = vadd.xlane.f32.xlu0 %v1133
    %v1135 = vpop.xlane.xlu0 %1134
    %v1136 = vrcp.pop 32.0
    %v1137 = vmul.f32 %v1132, %v1136
    %v1138 = vmul.f32 %v1135, %v1136
    %v1139 = vsub.f32 %v1128, %v1137
    %v1140 = vsub.f32 %v1129, %v1138
    %v1141 = vmul.f32 %v1139, %v1139
    %v1142 = vmul.f32 %v1140, %v1140
    %v1143 = vsel %vm80, %v1141, 0.0
    %1144 = vadd.xlane.f32.xlu0 %v1143
    %v1145 = vpop.xlane.xlu0 %1144
    %v1146 = vsel %vm80, %v1142, 0.0
    %1147 = vadd.xlane.f32.xlu0 %v1146
    %v1148 = vpop.xlane.xlu0 %1147
    %v1149 = vmul.f32 %v1145, %v1136
    %v1150 = vmul.f32 %v1148, %v1136
    %v1151 = vadd.f32 %v1149, 1e-05
    %v1152 = vadd.f32 %v1150, 1e-05
    %v1153 = vrsqrt.pop %v1151
    %v1154 = vrsqrt.pop %v1152
    %v1155 = vmul.f32 %v1139, %v1153
    %v1156 = vmul.f32 %v1140, %v1154
    %v1157 = vlaneseq
    %v1158 = vshrl.u32 %v1157, 7
    %v1159 = vsub.s32 0, %v1158
    %v1160 = vrot.slane %v69, %v1159
    %v1161 = vmul.f32 %v1155, %v1160
    %v1162 = vmul.f32 %v1156, %v1160
    %v1163 = vlaneseq
    %v1164 = vshrl.u32 %v1163, 7
    %v1165 = vsub.s32 0, %v1164
    %v1166 = vrot.slane %v70, %v1165
    %v1167 = vadd.f32 %v1161, %v1166
    %v1168 = vadd.f32 %v1162, %v1166
    %v1169 = vlaneseq
    %v1170 = vshrl.u32 %v1169, 7
    %v1171 = vsub.s32 0, %v1170
    %v1172 = vrot.slane %v71, %v1171
    %v1174 = vsel %vm80, %v1167, 0
    %v1177 = vsel %vm80, %v1168, 0
    %1179 = vmatprep.subr.mxu0 0.0
    %1180 = vmatpush1.msra.mxu0 %v47
    %1181 = vmatprep.subr.mxu0 0.0
    %1182 = vmatpush1.msra.mxu0 %v48
    %1183 = vmatprep.subr.mxu0 0.0
    %1184 = vmatpush1.msra.mxu0 %v49
    %1185 = vmatprep.subr.mxu0 0.0
    %1186 = vmatpush1.msra.mxu0 %v50
    %1187 = vmatprep.subr.mxu0 0.0
    %1188 = vmatpush1.msra.mxu0 0.0
    %1189 = vmatprep.subr.mxu0 0.0
    %1190 = vmatpush1.msra.mxu0 0.0
    %1191 = vmatprep.subr.mxu0 0.0
    %1192 = vmatpush1.msra.mxu0 0.0
    %1193 = vmatprep.subr.mxu0 0.0
    %1194 = vmatpush1.msra.mxu0 0.0
    %1195 = vmatprep.subr.mxu0 0.0
    %1196 = vmatpush1.msra.mxu0 0.0
    %1197 = vmatprep.subr.mxu0 0.0
    %1198 = vmatpush1.msra.mxu0 0.0
    %1199 = vmatprep.subr.mxu0 0.0
    %1200 = vmatpush1.msra.mxu0 0.0
    %1201 = vmatprep.subr.mxu0 0.0
    %1202 = vmatpush1.msra.mxu0 0.0
    %1203 = vmatprep.subr.mxu0 0.0
    %1204 = vmatpush1.msra.mxu0 0.0
    %1205 = vmatprep.subr.mxu0 0.0
    %1206 = vmatpush1.msra.mxu0 0.0
    %1207 = vmatprep.subr.mxu0 0.0
    %1208 = vmatpush1.msra.mxu0 0.0
    %1209 = vmatprep.subr.mxu0 0.0
    %1210 = vmatpush1.msra.mxu0 0.0
    %1211 = vmatprep.subr.mxu0 0.0
    %1212 = vmatpush1.msra.mxu0 0.0
    %1213 = vmatprep.subr.mxu0 0.0
    %1214 = vmatpush1.msra.mxu0 0.0
    %1215 = vmatprep.subr.mxu0 0.0
    %1216 = vmatpush1.msra.mxu0 0.0
    %1217 = vmatprep.subr.mxu0 0.0
    %1218 = vmatpush1.msra.mxu0 0.0
    %1219 = vmatprep.subr.mxu0 0.0
    %1220 = vmatpush1.msra.mxu0 0.0
    %1221 = vmatprep.subr.mxu0 0.0
    %1222 = vmatpush1.msra.mxu0 0.0
    %1223 = vmatprep.subr.mxu0 0.0
    %1224 = vmatpush1.msra.mxu0 0.0
    %1225 = vmatprep.subr.mxu0 0.0
    %1226 = vmatpush1.msra.mxu0 0.0
    %1227 = vmatprep.subr.mxu0 0.0
    %1228 = vmatpush1.msra.mxu0 0.0
    %1229 = vmatprep.subr.mxu0 0.0
    %1230 = vmatpush1.msra.mxu0 0.0
    %1231 = vmatprep.subr.mxu0 0.0
    %1232 = vmatpush1.msra.mxu0 0.0
    %1233 = vmatprep.subr.mxu0 0.0
    %1234 = vmatpush1.msra.mxu0 0.0
    %1235 = vmatprep.subr.mxu0 0.0
    %1236 = vmatpush1.msra.mxu0 0.0
    %1237 = vmatprep.subr.mxu0 0.0
    %1238 = vmatpush1.msra.mxu0 0.0
    %1239 = vmatprep.subr.mxu0 0.0
    %1240 = vmatpush1.msra.mxu0 0.0
    %1241 = vmatprep.subr.mxu0 0.0
    %1242 = vmatpush1.msra.mxu0 0.0
    %1243 = vmatprep.mubr.f32.mxu0 0.0
    %1244 = vmatmul.mubr.f32.gmra.mrb[0].mxu0 %v1174
    %v1245 = vpop.f32.mrb[0].mxu0
    %v1246 = vadd.f32 %v1172, %v1245
    %v1247 = vpop.f32.mrb[0].mxu0
    %1248 = vmatprep.mubr.f32.mxu0 0.0
    %1249 = vmatmul.mubr.f32.gmra.mrb[0].mxu0 %v1177
    %v1250 = vpop.f32.mrb[0].mxu0
    %v1251 = vadd.f32 %v1172, %v1250
    %v1252 = vpop.f32.mrb[0].mxu0
    %1253 = vdwg.mxu0
    %v1254 = vmax.f32 %v1246, 0.0
    %v1255 = vmax.f32 %v1251, 0.0
    %v1256 = vlaneseq
    %v1257 = vshrl.u32 %v1256, 7
    %v1258 = vsub.s32 0, %v1257
    %v1259 = vrot.slane %v72, %v1258
    %vm1260 = vcmask 523264
    %v1262 = vsel %vm1260, %v1254, 0
    %v1265 = vsel %vm1260, %v1255, 0
    %1267 = vmatprep.subr.mxu0 0.0
    %1268 = vmatpush1.msra.mxu0 %v51
    %1269 = vmatprep.subr.mxu0 0.0
    %1270 = vmatpush1.msra.mxu0 %v52
    %1271 = vmatprep.subr.mxu0 0.0
    %1272 = vmatpush1.msra.mxu0 %v53
    %1273 = vmatprep.subr.mxu0 0.0
    %1274 = vmatpush1.msra.mxu0 %v54
    %1275 = vmatprep.subr.mxu0 0.0
    %1276 = vmatpush1.msra.mxu0 %v55
    %1277 = vmatprep.subr.mxu0 0.0
    %1278 = vmatpush1.msra.mxu0 %v56
    %1279 = vmatprep.subr.mxu0 0.0
    %1280 = vmatpush1.msra.mxu0 %v57
    %1281 = vmatprep.subr.mxu0 0.0
    %1282 = vmatpush1.msra.mxu0 %v58
    %1283 = vmatprep.subr.mxu0 0.0
    %1284 = vmatpush1.msra.mxu0 0.0
    %1285 = vmatprep.subr.mxu0 0.0
    %1286 = vmatpush1.msra.mxu0 0.0
    %1287 = vmatprep.subr.mxu0 0.0
    %1288 = vmatpush1.msra.mxu0 0.0
    %1289 = vmatprep.subr.mxu0 0.0
    %1290 = vmatpush1.msra.mxu0 0.0
    %1291 = vmatprep.subr.mxu0 0.0
    %1292 = vmatpush1.msra.mxu0 0.0
    %1293 = vmatprep.subr.mxu0 0.0
    %1294 = vmatpush1.msra.mxu0 0.0
    %1295 = vmatprep.subr.mxu0 0.0
    %1296 = vmatpush1.msra.mxu0 0.0
    %1297 = vmatprep.subr.mxu0 0.0
    %1298 = vmatpush1.msra.mxu0 0.0
    %1299 = vmatprep.subr.mxu0 0.0
    %1300 = vmatpush1.msra.mxu0 0.0
    %1301 = vmatprep.subr.mxu0 0.0
    %1302 = vmatpush1.msra.mxu0 0.0
    %1303 = vmatprep.subr.mxu0 0.0
    %1304 = vmatpush1.msra.mxu0 0.0
    %1305 = vmatprep.subr.mxu0 0.0
    %1306 = vmatpush1.msra.mxu0 0.0
    %1307 = vmatprep.subr.mxu0 0.0
    %1308 = vmatpush1.msra.mxu0 0.0
    %1309 = vmatprep.subr.mxu0 0.0
    %1310 = vmatpush1.msra.mxu0 0.0
    %1311 = vmatprep.subr.mxu0 0.0
    %1312 = vmatpush1.msra.mxu0 0.0
    %1313 = vmatprep.subr.mxu0 0.0
    %1314 = vmatpush1.msra.mxu0 0.0
    %1315 = vmatprep.subr.mxu0 0.0
    %1316 = vmatpush1.msra.mxu0 0.0
    %1317 = vmatprep.subr.mxu0 0.0
    %1318 = vmatpush1.msra.mxu0 0.0
    %1319 = vmatprep.subr.mxu0 0.0
    %1320 = vmatpush1.msra.mxu0 0.0
    %1321 = vmatprep.subr.mxu0 0.0
    %1322 = vmatpush1.msra.mxu0 0.0
    %1323 = vmatprep.subr.mxu0 0.0
    %1324 = vmatpush1.msra.mxu0 0.0
    %1325 = vmatprep.subr.mxu0 0.0
    %1326 = vmatpush1.msra.mxu0 0.0
    %1327 = vmatprep.subr.mxu0 0.0
    %1328 = vmatpush1.msra.mxu0 0.0
    %1329 = vmatprep.subr.mxu0 0.0
    %1330 = vmatpush1.msra.mxu0 0.0
    %1331 = vmatprep.mubr.f32.mxu0 0.0
    %1332 = vmatmul.mubr.f32.gmra.mrb[0].mxu0 %v1262
    %v1333 = vpop.f32.mrb[0].mxu0
    %v1334 = vadd.f32 %v1259, %v1333
    %v1335 = vpop.f32.mrb[0].mxu0
    %1336 = vmatprep.mubr.f32.mxu0 0.0
    %1337 = vmatmul.mubr.f32.gmra.mrb[0].mxu0 %v1265
    %v1338 = vpop.f32.mrb[0].mxu0
    %v1339 = vadd.f32 %v1259, %v1338
    %v1340 = vpop.f32.mrb[0].mxu0
    %1341 = vdwg.mxu0
    %v1342 = vadd.f32 %v1167, %v1334
    %v1343 = vadd.f32 %v1168, %v1339
    %v1344 = vsel %vm80, %v1342, 0.0
    %1345 = vadd.xlane.f32.xlu0 %v1344
    %v1346 = vpop.xlane.xlu0 %1345
    %v1347 = vsel %vm80, %v1343, 0.0
    %1348 = vadd.xlane.f32.xlu0 %v1347
    %v1349 = vpop.xlane.xlu0 %1348
    %v1350 = vmul.f32 %v1346, %v1136
    %v1351 = vmul.f32 %v1349, %v1136
    %v1352 = vsub.f32 %v1342, %v1350
    %v1353 = vsub.f32 %v1343, %v1351
    %v1354 = vmul.f32 %v1352, %v1352
    %v1355 = vmul.f32 %v1353, %v1353
    %v1356 = vsel %vm80, %v1354, 0.0
    %1357 = vadd.xlane.f32.xlu0 %v1356
    %v1358 = vpop.xlane.xlu0 %1357
    %v1359 = vsel %vm80, %v1355, 0.0
    %1360 = vadd.xlane.f32.xlu0 %v1359
    %v1361 = vpop.xlane.xlu0 %1360
    %v1362 = vmul.f32 %v1358, %v1136
    %v1363 = vmul.f32 %v1361, %v1136
    %v1364 = vadd.f32 %v1362, 1e-05
    %v1365 = vadd.f32 %v1363, 1e-05
    %v1366 = vrsqrt.pop %v1364
    %v1367 = vrsqrt.pop %v1365
    %v1368 = vmul.f32 %v1352, %v1366
    %v1369 = vmul.f32 %v1353, %v1367
    %v1370 = vlaneseq
    %v1371 = vshrl.u32 %v1370, 7
    %v1372 = vsub.s32 0, %v1371
    %v1373 = vrot.slane %v73, %v1372
    %v1374 = vmul.f32 %v1368, %v1373
    %v1375 = vmul.f32 %v1369, %v1373
    %v1376 = vlaneseq
    %v1377 = vshrl.u32 %v1376, 7
    %v1378 = vsub.s32 0, %v1377
    %v1379 = vrot.slane %v74, %v1378
    %v1380 = vadd.f32 %v1374, %v1379
    %v1381 = vadd.f32 %v1375, %v1379
    %vm1382 = vcmp.ne.f32.partialorder %v1380, %v1380
    %vm1383 = vcmp.ne.f32.partialorder %v1381, %v1381
    %v1384 = vsel %vm1382, 0.0, %v1380
    %v1385 = vsel %vm1383, 0.0, %v1381
    %vm1386 = vcmp.eq.s32.totalorder %v187, 0
    %vm1387 = vcmp.eq.s32.totalorder %v188, 0
    %v1388 = vsel %vm1386, 1, 0
    %v1389 = vsel %vm1387, 1, 0
    %vm1390 = vcmp.eq.s32.totalorder %v1388, 1
    %vm1391 = vcmp.eq.s32.totalorder %v1389, 1
    %v1392 = vsel %vm1390, 0.0, %v1384
    %v1393 = vsel %vm1391, 0.0, %v1385
    %v1394 = vlaneseq
    %v1395 = vshrl.u32 %v1394, 7
    %v1396 = vsub.s32 0, %v1395
    %v1397 = vrot.slane %v75, %v1396
    %v1399 = vsel %vm80, %v1392, 0
    %v1402 = vsel %vm80, %v1393, 0
    %1404 = vmatprep.subr.mxu0 0.0
    %1405 = vmatpush1.msra.mxu0 %v63
    %1406 = vmatprep.subr.mxu0 0.0
    %1407 = vmatpush1.msra.mxu0 %v64
    %1408 = vmatprep.subr.mxu0 0.0
    %1409 = vmatpush1.msra.mxu0 %v65
    %1410 = vmatprep.subr.mxu0 0.0
    %1411 = vmatpush1.msra.mxu0 %v66
    %1412 = vmatprep.subr.mxu0 0.0
    %1413 = vmatpush1.msra.mxu0 0.0
    %1414 = vmatprep.subr.mxu0 0.0
    %1415 = vmatpush1.msra.mxu0 0.0
    %1416 = vmatprep.subr.mxu0 0.0
    %1417 = vmatpush1.msra.mxu0 0.0
    %1418 = vmatprep.subr.mxu0 0.0
    %1419 = vmatpush1.msra.mxu0 0.0
    %1420 = vmatprep.subr.mxu0 0.0
    %1421 = vmatpush1.msra.mxu0 0.0
    %1422 = vmatprep.subr.mxu0 0.0
    %1423 = vmatpush1.msra.mxu0 0.0
    %1424 = vmatprep.subr.mxu0 0.0
    %1425 = vmatpush1.msra.mxu0 0.0
    %1426 = vmatprep.subr.mxu0 0.0
    %1427 = vmatpush1.msra.mxu0 0.0
    %1428 = vmatprep.subr.mxu0 0.0
    %1429 = vmatpush1.msra.mxu0 0.0
    %1430 = vmatprep.subr.mxu0 0.0
    %1431 = vmatpush1.msra.mxu0 0.0
    %1432 = vmatprep.subr.mxu0 0.0
    %1433 = vmatpush1.msra.mxu0 0.0
    %1434 = vmatprep.subr.mxu0 0.0
    %1435 = vmatpush1.msra.mxu0 0.0
    %1436 = vmatprep.subr.mxu0 0.0
    %1437 = vmatpush1.msra.mxu0 0.0
    %1438 = vmatprep.subr.mxu0 0.0
    %1439 = vmatpush1.msra.mxu0 0.0
    %1440 = vmatprep.subr.mxu0 0.0
    %1441 = vmatpush1.msra.mxu0 0.0
    %1442 = vmatprep.subr.mxu0 0.0
    %1443 = vmatpush1.msra.mxu0 0.0
    %1444 = vmatprep.subr.mxu0 0.0
    %1445 = vmatpush1.msra.mxu0 0.0
    %1446 = vmatprep.subr.mxu0 0.0
    %1447 = vmatpush1.msra.mxu0 0.0
    %1448 = vmatprep.subr.mxu0 0.0
    %1449 = vmatpush1.msra.mxu0 0.0
    %1450 = vmatprep.subr.mxu0 0.0
    %1451 = vmatpush1.msra.mxu0 0.0
    %1452 = vmatprep.subr.mxu0 0.0
    %1453 = vmatpush1.msra.mxu0 0.0
    %1454 = vmatprep.subr.mxu0 0.0
    %1455 = vmatpush1.msra.mxu0 0.0
    %1456 = vmatprep.subr.mxu0 0.0
    %1457 = vmatpush1.msra.mxu0 0.0
    %1458 = vmatprep.subr.mxu0 0.0
    %1459 = vmatpush1.msra.mxu0 0.0
    %1460 = vmatprep.subr.mxu0 0.0
    %1461 = vmatpush1.msra.mxu0 0.0
    %1462 = vmatprep.subr.mxu0 0.0
    %1463 = vmatpush1.msra.mxu0 0.0
    %1464 = vmatprep.subr.mxu0 0.0
    %1465 = vmatpush1.msra.mxu0 0.0
    %1466 = vmatprep.subr.mxu0 0.0
    %1467 = vmatpush1.msra.mxu0 0.0
    %1468 = vmatprep.mubr.f32.mxu0 0.0
    %1469 = vmatmul.mubr.f32.gmra.mrb[0].mxu0 %v1399
    %v1470 = vpop.f32.mrb[0].mxu0
    %v1471 = vadd.f32 %v1397, %v1470
    %v1472 = vpop.f32.mrb[0].mxu0
    %1473 = vmatprep.mubr.f32.mxu0 0.0
    %1474 = vmatmul.mubr.f32.gmra.mrb[0].mxu0 %v1402
    %v1475 = vpop.f32.mrb[0].mxu0
    %v1476 = vadd.f32 %v1397, %v1475
    %v1477 = vpop.f32.mrb[0].mxu0
    %1478 = vdwg.mxu0
    %1481 = vrot.lane.b32.xlu0 %v1471, 32
    %v1482 = vpop.permute.xlu0 %1481
    %1483 = vrot.lane.b32.xlu0 %v1476, 32
    %v1484 = vpop.permute.xlu0 %1483
    %v1487 = vsel %vm80, %v1392, %v1482
    %v1488 = vsel %vm80, %v1393, %v1484
    %1489 = vst.msk [vmem:[%s3] sm:$0xff] %vm1260, %v1487
    %1490 = vst.msk [vmem:[%s3 + $0x8] sm:$0xff] %vm1260, %v1488
    // Predicated region
    $region22: #{transformer_encoder_forward.1} parent=1 // pred_check
      _
    $region23: #{transformer_encoder_forward.1} parent=1 // pred_check_branch
      %1492 = sbr.rel (0) target = $region25
    $region24: #{transformer_encoder_forward.1} parent=1 // pred_region
      _
    $region25: #{transformer_encoder_forward.1} parent=1 // pred_fallthru
      _
    // Predicated region
    $region26: #{transformer_encoder_forward.1} parent=1 // pred_check
      _
    $region27: #{transformer_encoder_forward.1} parent=1 // pred_check_branch
      %1494 = sbr.rel (0) target = $region29
    $region28: #{transformer_encoder_forward.1} parent=1 // pred_region
      _
    $region29: #{transformer_encoder_forward.1} parent=1 // pred_fallthru
      _
    %1495 = vsyncpa [#allocation4], 1
    %1496 = vsyncpa [#allocation5], 1

</llo_original>
